<compile_context>
chip_gen: v5e
topology: v5e:2x2
jax: 0.10.0
libtpu: 0.0.40
codegen_flags: <defaults>
</compile_context>

<pallas_src>
import functools

import jax
import jax.numpy as jnp
from jax.experimental import pallas as pl
from jax.experimental.pallas import tpu as pltpu

LANE = 128


def _round_up(x, m):
    return ((x + m - 1) // m) * m


def _pad2d(x, rows, cols):
    return jnp.pad(x, ((0, rows - x.shape[0]), (0, cols - x.shape[1])))


def _choose_tile(n):
    """Pad N to a multiple of 128; use 256 row/k tiles when that divides."""
    n_p = _round_up(max(n, 1), LANE)
    tile = 256 if n_p % 256 == 0 else 128
    return n_p, tile


# ----------------------------- Pallas kernels ------------------------------ #
def _xw_kernel(x_ref, w_ref, o_ref):
    # Row tile of X @ full W on the MXU, f32 accumulation, bf16 store.
    o_ref[...] = jnp.dot(
        x_ref[...], w_ref[...],
        preferred_element_type=jnp.float32).astype(o_ref.dtype)


def feature_transform(x, w, *, tile, out_dtype):
    """out = x @ w, row-tiled over the node dimension (used once, layer 0)."""
    n_p, f_in_p = x.shape
    f_out_p = w.shape[1]
    return pl.pallas_call(
        _xw_kernel,
        out_shape=jax.ShapeDtypeStruct((n_p, f_out_p), out_dtype),
        grid=(n_p // tile,),
        in_specs=[
            pl.BlockSpec((tile, f_in_p), lambda i: (i, 0)),     # X row tile
            pl.BlockSpec((f_in_p, f_out_p), lambda i: (0, 0)),  # W (full)
        ],
        out_specs=pl.BlockSpec((tile, f_out_p), lambda i: (i, 0)),
        compiler_params=pltpu.CompilerParams(
            dimension_semantics=("parallel",)),
    )(x, w)


def _gcn_layer_kernel(a_ref, h_ref, b_ref, *rest, apply_relu, fuse_next):
    # rest = (w_next_ref,) o_ref, acc_ref
    if fuse_next:
        wn_ref, o_ref, acc_ref = rest
    else:
        o_ref, acc_ref = rest

    k = pl.program_id(1)

    @pl.when(k == 0)
    def _():
        acc_ref[...] = jnp.zeros_like(acc_ref)

    # MXU-bound inner loop: acc += A[i,k] @ H[k]
    acc_ref[...] += jnp.dot(a_ref[...], h_ref[...],
                            preferred_element_type=jnp.float32)

    @pl.when(k == pl.num_programs(1) - 1)
    def _():
        z = acc_ref[...] + b_ref[...]          # bias broadcast once per tile
        if apply_relu:
            z = jnp.maximum(z, 0.0)
        if fuse_next:
            # Fuse the next layer's feature transform: out = relu(z) @ W_next.
            o_ref[...] = jnp.dot(
                z.astype(wn_ref.dtype), wn_ref[...],
                preferred_element_type=jnp.float32).astype(o_ref.dtype)
        else:
            o_ref[...] = z.astype(o_ref.dtype)


def gcn_aggregate(a_hat, xw, b, w_next, *, tile, apply_relu, out_dtype):
    """One GCN layer: [relu](A_hat @ xw + b), optionally fused with @ w_next."""
    n_p = a_hat.shape[0]
    f_p = xw.shape[1]
    fuse_next = w_next is not None

    in_specs = [
        pl.BlockSpec((tile, tile), lambda i, k: (i, k)),   # A_hat tile
        pl.BlockSpec((tile, f_p), lambda i, k: (k, 0)),    # XW tile
        pl.BlockSpec((1, f_p), lambda i, k: (0, 0)),       # bias (fetched once)
    ]
    args = [a_hat, xw, b]
    if fuse_next:
        in_specs.append(pl.BlockSpec(w_next.shape, lambda i, k: (0, 0)))
        args.append(w_next)
        out_w = w_next.shape[1]
    else:
        out_w = f_p

    kernel = functools.partial(_gcn_layer_kernel,
                               apply_relu=apply_relu, fuse_next=fuse_next)
    return pl.pallas_call(
        kernel,
        out_shape=jax.ShapeDtypeStruct((n_p, out_w), out_dtype),
        grid=(n_p // tile, n_p // tile),
        in_specs=in_specs,
        out_specs=pl.BlockSpec((tile, out_w), lambda i, k: (i, 0)),
        scratch_shapes=[pltpu.VMEM((tile, f_p), jnp.float32)],
        compiler_params=pltpu.CompilerParams(
            dimension_semantics=("parallel", "arbitrary")),
    )(*args)


# ------------------------------ JAX glue ----------------------------------- #
def build_gcn_norm_adj(edge_index, num_nodes):
    """Dense normalized adjacency matching PyG GCNConv's gcn_norm
    (add self loops, symmetric D^-1/2 (A+I) D^-1/2 normalization)."""
    src, dst = edge_index[0], edge_index[1]
    a = jnp.zeros((num_nodes, num_nodes), jnp.float32)
    a = a.at[dst, src].add(1.0)                    # messages flow src -> dst
    a = a + jnp.eye(num_nodes, dtype=jnp.float32)  # self loops
    deg = a.sum(axis=1)
    dinv = jnp.where(deg > 0, 1.0 / jnp.sqrt(deg), 0.0)
    return dinv[:, None] * a * dinv[None, :]


@functools.partial(jax.jit, static_argnames=("num_layers",))
def gnn_forward(params, a_hat, x, num_layers):
    """Mirrors GNN.forward: num_layers convs with ReLU, then a final conv."""
    n = x.shape[0]
    n_p, tile = _choose_tile(n)

    a_p = _pad2d(a_hat, n_p, n_p).astype(jnp.bfloat16)

    # Pad weights / biases to lane multiples (zero padding keeps results exact
    # for the valid slice).
    n_convs = num_layers + 1
    ws, bs = [], []
    for li in range(n_convs):
        w, b = params[li]
        f_i_p = _round_up(w.shape[0], LANE)
        f_o_p = _round_up(w.shape[1], LANE)
        ws.append(_pad2d(w, f_i_p, f_o_p).astype(jnp.bfloat16))
        bs.append(_pad2d(b, 1, f_o_p).astype(jnp.float32))

    x_p = _pad2d(x.astype(jnp.float32), n_p,
                 _round_up(x.shape[1], LANE)).astype(jnp.bfloat16)

    # Layer 0's feature transform; every later transform is fused into the
    # previous layer's aggregation epilogue.
    xw = feature_transform(x_p, ws[0], tile=tile, out_dtype=jnp.bfloat16)

    for li in range(n_convs):
        is_last = li == n_convs - 1
        xw = gcn_aggregate(
            a_p, xw, bs[li],
            w_next=None if is_last else ws[li + 1],
            tile=tile,
            apply_relu=not is_last,
            out_dtype=jnp.float32 if is_last else jnp.bfloat16)

    f_out = params[-1][0].shape[1]
    return xw[:n, :f_out]


def reference_forward(params, a_hat, x, num_layers):
    h = x.astype(jnp.float32)
    for li in range(num_layers + 1):
        w, b = params[li]
        z = a_hat @ (h @ w) + b
        h = jnp.maximum(z, 0.0) if li < num_layers else z
    return h


# ------------------------------- Demo -------------------------------------- #
if __name__ == "__main__":
    key = jax.random.PRNGKey(0)

    # Small synthetic graph / model sizes (N pads to 384 -> the aggregation
    # kernel runs a 3x3 tiled grid with real k-accumulation).
    N = 300
    in_channels = 8
    hidden_channels = 32
    out_channels = 4
    num_layers = 2         # -> 3 GCNConv layers total, like the PyTorch module

    # Node features (data.x)
    key, kx = jax.random.split(key)
    x = jax.random.normal(kx, (N, in_channels), jnp.float32)

    # Edge index: bidirectional ring graph, shape (2, E)
    src = jnp.arange(N, dtype=jnp.int32)
    dst = (src + 1) % N
    edge_index = jnp.stack(
        [jnp.concatenate([src, dst]), jnp.concatenate([dst, src])], axis=0)

    # Deterministic parameter init (glorot-uniform weights, zero bias),
    # matching GCNConv parameter shapes.
    dims = [in_channels] + [hidden_channels] * num_layers + [out_channels]
    params = []
    for li in range(num_layers + 1):
        key, kw = jax.random.split(key)
        fan_in, fan_out = dims[li], dims[li + 1]
        limit = (6.0 / (fan_in + fan_out)) ** 0.5
        w = jax.random.uniform(kw, (fan_in, fan_out), jnp.float32, -limit, limit)
        b = jnp.zeros((1, fan_out), jnp.float32)
        params.append((w, b))

    a_hat = build_gcn_norm_adj(edge_index, N)

    out = gnn_forward(params, a_hat, x, num_layers)
    out = jax.block_until_ready(out)
    assert out.shape == (N, out_channels)

    # Sanity check vs pure-JAX f32 reference (loose tol: inputs streamed bf16).
    ref = reference_forward(params, a_hat, x, num_layers)
    max_err = float(jnp.max(jnp.abs(out - ref)))
    scale = float(jnp.max(jnp.abs(ref)))
    assert max_err <= 0.05 * max(1.0, scale), (max_err, scale)

    print("KERNEL_OK")
</pallas_src>

<mosaic_0001>
module attributes {stable_mosaic.version = 11 : i64} {
  func.func @_xw_kernel(%arg0: i32, %arg1: memref<128x128xbf16, #tpu.memory_space<vmem>>, %arg2: memref<128x128xbf16, #tpu.memory_space<vmem>>, %arg3: memref<128x128xbf16, #tpu.memory_space<vmem>>) attributes {dimension_semantics = [#tpu.dimension_semantics<parallel>], iteration_bounds = array<i64: 3>, scalar_prefetch = 0 : i64, scratch_operands = 0 : i64, tpu.core_type = #tpu.core_type<tc>, window_params = [{transform_indices = @transform_0, window_bounds = array<i64: 128, 128>}, {pipeline_mode = #tpu.pipeline_mode<synchronous>, transform_indices = @transform_1, window_bounds = array<i64: 128, 128>}, {transform_indices = @transform_2, window_bounds = array<i64: 128, 128>}]} {
    %c0 = arith.constant 0 : index
    %c0_0 = arith.constant 0 : index
    %0 = vector.load %arg1[%c0, %c0_0] : memref<128x128xbf16, #tpu.memory_space<vmem>>, vector<128x128xbf16>
    %c0_1 = arith.constant 0 : index
    %c0_2 = arith.constant 0 : index
    %1 = vector.load %arg2[%c0_1, %c0_2] : memref<128x128xbf16, #tpu.memory_space<vmem>>, vector<128x128xbf16>
    %cst = arith.constant dense<0.000000e+00> : vector<128x128xf32>
    %2 = tpu.matmul %0, %1, %cst {dimension_numbers = #tpu.dot_dimension_numbers<[1], [0], [0], [1], [0, 0, 1, 1], [], []>} : vector<128x128xbf16>, vector<128x128xbf16>, vector<128x128xf32> -> vector<128x128xf32>
    %3 = arith.truncf %2 : vector<128x128xf32> to vector<128x128xbf16>
    %c0_3 = arith.constant 0 : index
    %c0_4 = arith.constant 0 : index
    %4 = vector.load %arg3[%c0_3, %c0_4] : memref<128x128xbf16, #tpu.memory_space<vmem>>, vector<128x128xbf16>
    tpu.vector_store %arg3[%c0_3, %c0_4], %3 {strides = array<i32>} : memref<128x128xbf16, #tpu.memory_space<vmem>>, vector<128x128xbf16>,
    return
  }
  func.func @transform_0(%arg0: i32) -> (i32, i32) {
    %c0_i32 = arith.constant 0 : i32
    %c0_i32_0 = arith.constant 0 : i32
    return %arg0, %c0_i32 : i32, i32
  }
  func.func @transform_1(%arg0: i32) -> (i32, i32) {
    %c0_i32 = arith.constant 0 : i32
    %c0_i32_0 = arith.constant 0 : i32
    %c0_i32_1 = arith.constant 0 : i32
    return %c0_i32, %c0_i32_0 : i32, i32
  }
  func.func @transform_2(%arg0: i32) -> (i32, i32) {
    %c0_i32 = arith.constant 0 : i32
    %c0_i32_0 = arith.constant 0 : i32
    return %arg0, %c0_i32 : i32, i32
  }
}

module attributes {stable_mosaic.version = 11 : i64} {
  func.func @_gcn_layer_kernel(%arg0: i32, %arg1: i32, %arg2: memref<128x128xbf16, #tpu.memory_space<vmem>>, %arg3: memref<128x128xbf16, #tpu.memory_space<vmem>>, %arg4: memref<1x128xf32, #tpu.memory_space<vmem>>, %arg5: memref<128x128xbf16, #tpu.memory_space<vmem>>, %arg6: memref<128x128xbf16, #tpu.memory_space<vmem>>, %arg7: memref<128x128xf32, #tpu.memory_space<vmem>>) attributes {dimension_semantics = [#tpu.dimension_semantics<parallel>, #tpu.dimension_semantics<arbitrary>], iteration_bounds = array<i64: 3, 3>, scalar_prefetch = 0 : i64, scratch_operands = 1 : i64, tpu.core_type = #tpu.core_type<tc>, window_params = [{transform_indices = @transform_0, window_bounds = array<i64: 128, 128>}, {transform_indices = @transform_1, window_bounds = array<i64: 128, 128>}, {pipeline_mode = #tpu.pipeline_mode<synchronous>, transform_indices = @transform_2, window_bounds = array<i64: 1, 128>}, {pipeline_mode = #tpu.pipeline_mode<synchronous>, transform_indices = @transform_3, window_bounds = array<i64: 128, 128>}, {transform_indices = @transform_4, window_bounds = array<i64: 128, 128>}]} {
    %c0_i32 = arith.constant 0 : i32
    %0 = arith.cmpi eq, %arg1, %c0_i32 : i32
    %1 = arith.extui %0 : i1 to i32
    %c0_i32_0 = arith.constant 0 : i32
    %2 = arith.cmpi ne, %1, %c0_i32_0 : i32
    scf.if %2 {
      %cst_9 = arith.constant 0.000000e+00 : f32
      %12 = vector.broadcast %cst_9 : f32 to vector<128x128xf32>
      %c0_10 = arith.constant 0 : index
      %c0_11 = arith.constant 0 : index
      %13 = vector.load %arg7[%c0_10, %c0_11] : memref<128x128xf32, #tpu.memory_space<vmem>>, vector<128x128xf32>
      tpu.vector_store %arg7[%c0_10, %c0_11], %12 {strides = array<i32>} : memref<128x128xf32, #tpu.memory_space<vmem>>, vector<128x128xf32>,
    } else {
    }
    %c0 = arith.constant 0 : index
    %c0_1 = arith.constant 0 : index
    %3 = vector.load %arg7[%c0, %c0_1] : memref<128x128xf32, #tpu.memory_space<vmem>>, vector<128x128xf32>
    %c0_2 = arith.constant 0 : index
    %c0_3 = arith.constant 0 : index
    %4 = vector.load %arg2[%c0_2, %c0_3] : memref<128x128xbf16, #tpu.memory_space<vmem>>, vector<128x128xbf16>
    %c0_4 = arith.constant 0 : index
    %c0_5 = arith.constant 0 : index
    %5 = vector.load %arg3[%c0_4, %c0_5] : memref<128x128xbf16, #tpu.memory_space<vmem>>, vector<128x128xbf16>
    %cst = arith.constant dense<0.000000e+00> : vector<128x128xf32>
    %6 = tpu.matmul %4, %5, %cst {dimension_numbers = #tpu.dot_dimension_numbers<[1], [0], [0], [1], [0, 0, 1, 1], [], []>} : vector<128x128xbf16>, vector<128x128xbf16>, vector<128x128xf32> -> vector<128x128xf32>
    %7 = arith.addf %3, %6 : vector<128x128xf32>
    %c0_6 = arith.constant 0 : index
    %c0_7 = arith.constant 0 : index
    %8 = vector.load %arg7[%c0_6, %c0_7] : memref<128x128xf32, #tpu.memory_space<vmem>>, vector<128x128xf32>
    tpu.vector_store %arg7[%c0_6, %c0_7], %7 {strides = array<i32>} : memref<128x128xf32, #tpu.memory_space<vmem>>, vector<128x128xf32>,
    %c2_i32 = arith.constant 2 : i32
    %9 = arith.cmpi eq, %arg1, %c2_i32 : i32
    %10 = arith.extui %9 : i1 to i32
    %c0_i32_8 = arith.constant 0 : i32
    %11 = arith.cmpi ne, %10, %c0_i32_8 : i32
    scf.if %11 {
      %c0_9 = arith.constant 0 : index
      %c0_10 = arith.constant 0 : index
      %12 = vector.load %arg7[%c0_9, %c0_10] : memref<128x128xf32, #tpu.memory_space<vmem>>, vector<128x128xf32>
      %c0_11 = arith.constant 0 : index
      %c0_12 = arith.constant 0 : index
      %13 = vector.load %arg4[%c0_11, %c0_12] : memref<1x128xf32, #tpu.memory_space<vmem>>, vector<1x128xf32>
      %14 = vector.broadcast %13 : vector<1x128xf32> to vector<128x128xf32>
      %15 = arith.addf %12, %14 : vector<128x128xf32>
      %cst_13 = arith.constant 0.000000e+00 : f32
      %16 = vector.broadcast %cst_13 : f32 to vector<128x128xf32>
      %17 = arith.maximumf %15, %16 : vector<128x128xf32>
      %18 = arith.truncf %17 : vector<128x128xf32> to vector<128x128xbf16>
      %c0_14 = arith.constant 0 : index
      %c0_15 = arith.constant 0 : index
      %19 = vector.load %arg5[%c0_14, %c0_15] : memref<128x128xbf16, #tpu.memory_space<vmem>>, vector<128x128xbf16>
      %cst_16 = arith.constant dense<0.000000e+00> : vector<128x128xf32>
      %20 = tpu.matmul %18, %19, %cst_16 {dimension_numbers = #tpu.dot_dimension_numbers<[1], [0], [0], [1], [0, 0, 1, 1], [], []>} : vector<128x128xbf16>, vector<128x128xbf16>, vector<128x128xf32> -> vector<128x128xf32>
      %21 = arith.truncf %20 : vector<128x128xf32> to vector<128x128xbf16>
      %c0_17 = arith.constant 0 : index
      %c0_18 = arith.constant 0 : index
      %22 = vector.load %arg6[%c0_17, %c0_18] : memref<128x128xbf16, #tpu.memory_space<vmem>>, vector<128x128xbf16>
      tpu.vector_store %arg6[%c0_17, %c0_18], %21 {strides = array<i32>} : memref<128x128xbf16, #tpu.memory_space<vmem>>, vector<128x128xbf16>,
    } else {
    }
    return
  }
  func.func @transform_0(%arg0: i32, %arg1: i32) -> (i32, i32) {
    %c0_i32 = arith.constant 0 : i32
    return %arg0, %arg1 : i32, i32
  }
  func.func @transform_1(%arg0: i32, %arg1: i32) -> (i32, i32) {
    %c0_i32 = arith.constant 0 : i32
    %c0_i32_0 = arith.constant 0 : i32
    return %arg1, %c0_i32 : i32, i32
  }
  func.func @transform_2(%arg0: i32, %arg1: i32) -> (i32, i32) {
    %c0_i32 = arith.constant 0 : i32
    %c0_i32_0 = arith.constant 0 : i32
    %c0_i32_1 = arith.constant 0 : i32
    return %c0_i32, %c0_i32_0 : i32, i32
  }
  func.func @transform_3(%arg0: i32, %arg1: i32) -> (i32, i32) {
    %c0_i32 = arith.constant 0 : i32
    %c0_i32_0 = arith.constant 0 : i32
    %c0_i32_1 = arith.constant 0 : i32
    return %c0_i32, %c0_i32_0 : i32, i32
  }
  func.func @transform_4(%arg0: i32, %arg1: i32) -> (i32, i32) {
    %c0_i32 = arith.constant 0 : i32
    %c0_i32_0 = arith.constant 0 : i32
    return %arg0, %c0_i32 : i32, i32
  }
}

module attributes {stable_mosaic.version = 11 : i64} {
  func.func @_gcn_layer_kernel(%arg0: i32, %arg1: i32, %arg2: memref<128x128xbf16, #tpu.memory_space<vmem>>, %arg3: memref<128x128xbf16, #tpu.memory_space<vmem>>, %arg4: memref<1x128xf32, #tpu.memory_space<vmem>>, %arg5: memref<128x128xf32, #tpu.memory_space<vmem>>, %arg6: memref<128x128xf32, #tpu.memory_space<vmem>>) attributes {dimension_semantics = [#tpu.dimension_semantics<parallel>, #tpu.dimension_semantics<arbitrary>], iteration_bounds = array<i64: 3, 3>, scalar_prefetch = 0 : i64, scratch_operands = 1 : i64, tpu.core_type = #tpu.core_type<tc>, window_params = [{transform_indices = @transform_0, window_bounds = array<i64: 128, 128>}, {transform_indices = @transform_1, window_bounds = array<i64: 128, 128>}, {pipeline_mode = #tpu.pipeline_mode<synchronous>, transform_indices = @transform_2, window_bounds = array<i64: 1, 128>}, {transform_indices = @transform_3, window_bounds = array<i64: 128, 128>}]} {
    %c0_i32 = arith.constant 0 : i32
    %0 = arith.cmpi eq, %arg1, %c0_i32 : i32
    %1 = arith.extui %0 : i1 to i32
    %c0_i32_0 = arith.constant 0 : i32
    %2 = arith.cmpi ne, %1, %c0_i32_0 : i32
    scf.if %2 {
      %cst_9 = arith.constant 0.000000e+00 : f32
      %12 = vector.broadcast %cst_9 : f32 to vector<128x128xf32>
      %c0_10 = arith.constant 0 : index
      %c0_11 = arith.constant 0 : index
      %13 = vector.load %arg6[%c0_10, %c0_11] : memref<128x128xf32, #tpu.memory_space<vmem>>, vector<128x128xf32>
      tpu.vector_store %arg6[%c0_10, %c0_11], %12 {strides = array<i32>} : memref<128x128xf32, #tpu.memory_space<vmem>>, vector<128x128xf32>,
    } else {
    }
    %c0 = arith.constant 0 : index
    %c0_1 = arith.constant 0 : index
    %3 = vector.load %arg6[%c0, %c0_1] : memref<128x128xf32, #tpu.memory_space<vmem>>, vector<128x128xf32>
    %c0_2 = arith.constant 0 : index
    %c0_3 = arith.constant 0 : index
    %4 = vector.load %arg2[%c0_2, %c0_3] : memref<128x128xbf16, #tpu.memory_space<vmem>>, vector<128x128xbf16>
    %c0_4 = arith.constant 0 : index
    %c0_5 = arith.constant 0 : index
    %5 = vector.load %arg3[%c0_4, %c0_5] : memref<128x128xbf16, #tpu.memory_space<vmem>>, vector<128x128xbf16>
    %cst = arith.constant dense<0.000000e+00> : vector<128x128xf32>
    %6 = tpu.matmul %4, %5, %cst {dimension_numbers = #tpu.dot_dimension_numbers<[1], [0], [0], [1], [0, 0, 1, 1], [], []>} : vector<128x128xbf16>, vector<128x128xbf16>, vector<128x128xf32> -> vector<128x128xf32>
    %7 = arith.addf %3, %6 : vector<128x128xf32>
    %c0_6 = arith.constant 0 : index
    %c0_7 = arith.constant 0 : index
    %8 = vector.load %arg6[%c0_6, %c0_7] : memref<128x128xf32, #tpu.memory_space<vmem>>, vector<128x128xf32>
    tpu.vector_store %arg6[%c0_6, %c0_7], %7 {strides = array<i32>} : memref<128x128xf32, #tpu.memory_space<vmem>>, vector<128x128xf32>,
    %c2_i32 = arith.constant 2 : i32
    %9 = arith.cmpi eq, %arg1, %c2_i32 : i32
    %10 = arith.extui %9 : i1 to i32
    %c0_i32_8 = arith.constant 0 : i32
    %11 = arith.cmpi ne, %10, %c0_i32_8 : i32
    scf.if %11 {
      %c0_9 = arith.constant 0 : index
      %c0_10 = arith.constant 0 : index
      %12 = vector.load %arg6[%c0_9, %c0_10] : memref<128x128xf32, #tpu.memory_space<vmem>>, vector<128x128xf32>
      %c0_11 = arith.constant 0 : index
      %c0_12 = arith.constant 0 : index
      %13 = vector.load %arg4[%c0_11, %c0_12] : memref<1x128xf32, #tpu.memory_space<vmem>>, vector<1x128xf32>
      %14 = vector.broadcast %13 : vector<1x128xf32> to vector<128x128xf32>
      %15 = arith.addf %12, %14 : vector<128x128xf32>
      %c0_13 = arith.constant 0 : index
      %c0_14 = arith.constant 0 : index
      %16 = vector.load %arg5[%c0_13, %c0_14] : memref<128x128xf32, #tpu.memory_space<vmem>>, vector<128x128xf32>
      tpu.vector_store %arg5[%c0_13, %c0_14], %15 {strides = array<i32>} : memref<128x128xf32, #tpu.memory_space<vmem>>, vector<128x128xf32>,
    } else {
    }
    return
  }
  func.func @transform_0(%arg0: i32, %arg1: i32) -> (i32, i32) {
    %c0_i32 = arith.constant 0 : i32
    return %arg0, %arg1 : i32, i32
  }
  func.func @transform_1(%arg0: i32, %arg1: i32) -> (i32, i32) {
    %c0_i32 = arith.constant 0 : i32
    %c0_i32_0 = arith.constant 0 : i32
    return %arg1, %c0_i32 : i32, i32
  }
  func.func @transform_2(%arg0: i32, %arg1: i32) -> (i32, i32) {
    %c0_i32 = arith.constant 0 : i32
    %c0_i32_0 = arith.constant 0 : i32
    %c0_i32_1 = arith.constant 0 : i32
    return %c0_i32, %c0_i32_0 : i32, i32
  }
  func.func @transform_3(%arg0: i32, %arg1: i32) -> (i32, i32) {
    %c0_i32 = arith.constant 0 : i32
    %c0_i32_0 = arith.constant 0 : i32
    return %arg0, %c0_i32 : i32, i32
  }
}

</mosaic_0001>

<llo_original>
// kernel: gnn_forward.4
$region0: #{gnn_forward.4}
  #allocation0 [shape = 'u32[]', space=smem, size = 0x4, offset = 0x4, fixed_abs, tag = 'smem constant byte address 0x4 - core index']
  #allocation1 [shape = 'u32[72,128]{1,0:T(1,128)}', space=vmem, size = 0x9000, scoped, tag = 'internal scratch']
  %s0 = inlined_call_operand.vmem [shape: bf16[384,128], index: 0, kind: input, shape index: {}]
  %s1 = inlined_call_operand.vmem [shape: bf16[128,128], index: 1, kind: input, shape index: {}]
  %s2 = inlined_call_operand.vmem [shape: bf16[384,128], index: 2, kind: output, shape index: {}]
  %s3 = sld [smem:[#allocation0]]
  $region41: #{gnn_forward.4} parent=0
    _
  %s5 = ssub.s32 1, %s3
  %s6 = scalar_select 0, %s5, %s3
  loop: start=0, step=1, limit=5
  $region2: #{gnn_forward.4} parent=0 // loop_pre_header
    _
  $region3: #{gnn_forward.4} parent=0 // loop_header
    %s8 = sphi 0, %s12
    %p9 = scmp.ge.s32.totalorder %s8, 5
    %s18 = sphi 0, %s20
    %s21 = sphi 0, %s18
    %s22 = sphi 0, %s21
    %s38 = sphi 0, %s22
    %s42 = sphi 0, %s42
    %s44 = sphi 0, %s42
    %s45 = sphi 0, %s44
    %s59 = sphi 0, %s45
    %s65 = sphi 0, %s67
    %s68 = sphi 0, %s65
    %s69 = sphi 0, %s68
    %s85 = sphi 0, %s69
  $region4: #{gnn_forward.4} parent=0 // loop_header_branch
    %11 = sbr.rel (%p9) target = $region8
  $region5: #{gnn_forward.4} parent=0 // loop_body
    %s13 = ssub.s32 %s8, 1
    %s14 = ssub.s32 %s8, 2
    %s15 = sadd.s32 %s8, 1
    %s16 = ssub.s32 %s8, %s15
    %p17 = scmp.eq.s32.totalorder %s16, 0
    %s19 = sadd.s32 %s18, 1
    %s20 = scalar_select %p17, %s18, %s19
    %p23 = pneg %p17
    %p24 = scmp.eq.s32.totalorder %s8, 2
    %p25 = por %p23, %p24
    %p26 = scmp.ne.s32.totalorder %s18, %s21
    %p27 = scmp.eq.s32.totalorder %s8, 0
    %p28 = por %p26, %p27
    %p29 = scmp.ne.s32.totalorder %s18, %s21
    %p30 = scmp.eq.s32.totalorder %s13, 2
    %p31 = por %p29, %p30
    %p32 = scmp.ne.s32.totalorder %s21, %s22
    %p33 = scmp.eq.s32.totalorder %s13, 0
    %p34 = por %p32, %p33
    %p35 = scmp.ne.s32.totalorder %s21, %s22
    %p36 = scmp.eq.s32.totalorder %s14, 2
    %p37 = por %p35, %p36
    %p39 = scmp.ne.s32.totalorder %s22, %s38
    %p40 = scmp.eq.s32.totalorder %s14, 0
    %p41 = por %p39, %p40
    %s43 = sadd.s32 %s42, 1
    %p46 = scmp.eq.s32.totalorder %s8, 2
    %p47 = scmp.ne.s32.totalorder %s42, %s44
    %p48 = scmp.eq.s32.totalorder %s8, 0
    %p49 = por %p47, %p48
    %p50 = scmp.ne.s32.totalorder %s42, %s44
    %p51 = scmp.eq.s32.totalorder %s13, 2
    %p52 = por %p50, %p51
    %p53 = scmp.ne.s32.totalorder %s44, %s45
    %p54 = scmp.eq.s32.totalorder %s13, 0
    %p55 = por %p53, %p54
    %p56 = scmp.ne.s32.totalorder %s44, %s45
    %p57 = scmp.eq.s32.totalorder %s14, 2
    %p58 = por %p56, %p57
    %p60 = scmp.ne.s32.totalorder %s45, %s59
    %p61 = scmp.eq.s32.totalorder %s14, 0
    %p62 = por %p60, %p61
    %s63 = ssub.s32 %s8, %s15
    %p64 = scmp.eq.s32.totalorder %s63, 0
    %s66 = sadd.s32 %s65, 1
    %s67 = scalar_select %p64, %s65, %s66
    %p70 = pneg %p64
    %p71 = scmp.eq.s32.totalorder %s8, 2
    %p72 = por %p70, %p71
    %p73 = scmp.ne.s32.totalorder %s65, %s68
    %p74 = scmp.eq.s32.totalorder %s8, 0
    %p75 = por %p73, %p74
    %p76 = scmp.ne.s32.totalorder %s65, %s68
    %p77 = scmp.eq.s32.totalorder %s13, 2
    %p78 = por %p76, %p77
    %p79 = scmp.ne.s32.totalorder %s68, %s69
    %p80 = scmp.eq.s32.totalorder %s13, 0
    %p81 = por %p79, %p80
    %p82 = scmp.ne.s32.totalorder %s68, %s69
    %p83 = scmp.eq.s32.totalorder %s14, 2
    %p84 = por %p82, %p83
    %p86 = scmp.ne.s32.totalorder %s69, %s85
    %p87 = scmp.eq.s32.totalorder %s14, 0
    %p88 = por %p86, %p87
    %p89 = scmp.le.s32.totalorder 1, %s8
    %p90 = scmp.lt.s32.totalorder %s8, 4
    %p91 = pnand %p89, %p90
    %p92 = pneg %p91
    // Predicated region
    $region9: #{gnn_forward.4} parent=5 // pred_check
      _
    $region10: #{gnn_forward.4} parent=5 // pred_check_branch
      %94 = sbr.rel (%p91) target = $region12
    $region11: #{gnn_forward.4} parent=5 // pred_region
      %s95 = ssub.s32 %s8, 1
      // Predicated region
      $region13: #{gnn_forward.4} parent=11 // pred_check
        %p96 = pneg %p55
      $region14: #{gnn_forward.4} parent=11 // pred_check_branch
        %98 = sbr.rel (%p96) target = $region16
      $region15: #{gnn_forward.4} parent=11 // pred_region
        _
      $region16: #{gnn_forward.4} parent=11 // pred_fallthru
        _
    $region12: #{gnn_forward.4} parent=5 // pred_fallthru
      _
    %p99 = scmp.lt.s32.totalorder %s8, 3
    // Predicated region
    $region17: #{gnn_forward.4} parent=5 // pred_check
      %p100 = pneg %p99
    $region18: #{gnn_forward.4} parent=5 // pred_check_branch
      %102 = sbr.rel (%p100) target = $region20
    $region19: #{gnn_forward.4} parent=5 // pred_region
      // Predicated region
      $region21: #{gnn_forward.4} parent=19 // pred_check
        %p103 = pneg %p28
      $region22: #{gnn_forward.4} parent=19 // pred_check_branch
        %105 = sbr.rel (%p103) target = $region24
      $region23: #{gnn_forward.4} parent=19 // pred_region
        %s106 = smul.u32 16, %s8
        %p107 = scmp.lt.s32.totalorder %s106, 47
        %s108 = scalar_select %p107, %s106, 47
        %s109 = smul.addr %s108, 4
        %s110 = scalar_lea.vmem %s0, %s109
        %s111 = smul.u32 16, %s8
      $region24: #{gnn_forward.4} parent=19 // pred_fallthru
        _
    $region20: #{gnn_forward.4} parent=5 // pred_fallthru
      _
    %p112 = scmp.le.s32.totalorder 1, %s8
    %p113 = scmp.lt.s32.totalorder %s8, 4
    %p114 = pnand %p112, %p113
    %p115 = pneg %p114
    // Predicated region
    $region25: #{gnn_forward.4} parent=5 // pred_check
      _
    $region26: #{gnn_forward.4} parent=5 // pred_check_branch
      %117 = sbr.rel (%p114) target = $region28
    $region27: #{gnn_forward.4} parent=5 // pred_region
      %s118 = ssub.s32 %s8, 1
      %s119 = smul.u32 16, %s13
      %p120 = scmp.lt.s32.totalorder %s119, 47
      %s121 = scalar_select %p120, %s119, 47
      %s122 = smul.addr %s121, 4
      %s123 = scalar_lea.vmem %s0, %s122
      %p124 = pneg %p34
      %p125 = pneg %p31
      %p126 = pneg %p55
      %p127 = pneg %p52
      %p128 = pneg %p81
      %p129 = pneg %p78
      %s130 = smul.u32 16, %s13
      %p131 = scmp.lt.s32.totalorder %s130, 47
      %s132 = scalar_select %p131, %s130, 47
      %s133 = smul.addr %s132, 4
      %s134 = scalar_lea.vmem %s2, %s133
      %s135 = smul.u32 16, %s13
      %p136 = scmp.lt.s32.totalorder %s135, 47
      %s137 = scalar_select %p136, %s135, 47
      %s138 = smul.addr %s137, 4
      %s139 = scalar_lea.vmem %s0, %s138
      %s140 = smul.u32 16, %s13
      %s141 = smul.u32 16, %s13
      %p142 = scmp.lt.s32.totalorder %s141, 47
      %s143 = scalar_select %p142, %s141, 47
      %s144 = smul.addr %s143, 4
      %s145 = scalar_lea.vmem %s2, %s144
      %s146 = smul.u32 16, %s13
      %v147 = vld [vmem:[%s139] sm:$0xf]
      %v148 = vld [vmem:[%s139 + $0x4] sm:$0xf]
      %v149 = vld [vmem:[%s139 + $0x8] sm:$0xf]
      %v150 = vld [vmem:[%s139 + $0xc] sm:$0xf]
      %v151 = vld [vmem:[%s139 + $0x10] sm:$0xf]
      %v152 = vld [vmem:[%s139 + $0x14] sm:$0xf]
      %v153 = vld [vmem:[%s139 + $0x18] sm:$0xf]
      %v154 = vld [vmem:[%s139 + $0x1c] sm:$0xf]
      %v155 = vld [vmem:[%s139 + $0x20] sm:$0xf]
      %v156 = vld [vmem:[%s139 + $0x24] sm:$0xf]
      %v157 = vld [vmem:[%s139 + $0x28] sm:$0xf]
      %v158 = vld [vmem:[%s139 + $0x2c] sm:$0xf]
      %v159 = vld [vmem:[%s139 + $0x30] sm:$0xf]
      %v160 = vld [vmem:[%s139 + $0x34] sm:$0xf]
      %v161 = vld [vmem:[%s139 + $0x38] sm:$0xf]
      %v162 = vld [vmem:[%s139 + $0x3c] sm:$0xf]
      %v163 = vld [vmem:[%s1] sm:$0xf]
      %v164 = vld [vmem:[%s1 + $0x4] sm:$0xf]
      %v165 = vld [vmem:[%s1 + $0x8] sm:$0xf]
      %v166 = vld [vmem:[%s1 + $0xc] sm:$0xf]
      %v167 = vld [vmem:[%s1 + $0x10] sm:$0xf]
      %v168 = vld [vmem:[%s1 + $0x14] sm:$0xf]
      %v169 = vld [vmem:[%s1 + $0x18] sm:$0xf]
      %v170 = vld [vmem:[%s1 + $0x1c] sm:$0xf]
      %v171 = vld [vmem:[%s1 + $0x20] sm:$0xf]
      %v172 = vld [vmem:[%s1 + $0x24] sm:$0xf]
      %v173 = vld [vmem:[%s1 + $0x28] sm:$0xf]
      %v174 = vld [vmem:[%s1 + $0x2c] sm:$0xf]
      %v175 = vld [vmem:[%s1 + $0x30] sm:$0xf]
      %v176 = vld [vmem:[%s1 + $0x34] sm:$0xf]
      %v177 = vld [vmem:[%s1 + $0x38] sm:$0xf]
      %v178 = vld [vmem:[%s1 + $0x3c] sm:$0xf]
      %v195 = vunpack.c.l.b16 %v147
      %v196 = vunpack.c.l.b16 %v148
      %v197 = vunpack.c.l.b16 %v149
      %v198 = vunpack.c.l.b16 %v150
      %v199 = vunpack.c.l.b16 %v151
      %v200 = vunpack.c.l.b16 %v152
      %v201 = vunpack.c.l.b16 %v153
      %v202 = vunpack.c.l.b16 %v154
      %v203 = vunpack.c.l.b16 %v155
      %v204 = vunpack.c.l.b16 %v156
      %v205 = vunpack.c.l.b16 %v157
      %v206 = vunpack.c.l.b16 %v158
      %v207 = vunpack.c.l.b16 %v159
      %v208 = vunpack.c.l.b16 %v160
      %v209 = vunpack.c.l.b16 %v161
      %v210 = vunpack.c.l.b16 %v162
      %v211 = vpack.c.b16 %v196, %v195
      %v212 = vpack.c.b16 %v198, %v197
      %v213 = vpack.c.b16 %v200, %v199
      %v214 = vpack.c.b16 %v202, %v201
      %v215 = vpack.c.b16 %v204, %v203
      %v216 = vpack.c.b16 %v206, %v205
      %v217 = vpack.c.b16 %v208, %v207
      %v218 = vpack.c.b16 %v210, %v209
      %v243 = vunpack.c.l.b16 %v163
      %v244 = vunpack.c.l.b16 %v164
      %v245 = vunpack.c.l.b16 %v165
      %v246 = vunpack.c.l.b16 %v166
      %v247 = vunpack.c.l.b16 %v167
      %v248 = vunpack.c.l.b16 %v168
      %v249 = vunpack.c.l.b16 %v169
      %v250 = vunpack.c.l.b16 %v170
      %v251 = vunpack.c.l.b16 %v171
      %v252 = vunpack.c.l.b16 %v172
      %v253 = vunpack.c.l.b16 %v173
      %v254 = vunpack.c.l.b16 %v174
      %v255 = vunpack.c.l.b16 %v175
      %v256 = vunpack.c.l.b16 %v176
      %v257 = vunpack.c.l.b16 %v177
      %v258 = vunpack.c.l.b16 %v178
      %v259 = vpack.c.b16 %v244, %v243
      %v260 = vpack.c.b16 %v246, %v245
      %v261 = vpack.c.b16 %v248, %v247
      %v262 = vpack.c.b16 %v250, %v249
      %v263 = vpack.c.b16 %v252, %v251
      %v264 = vpack.c.b16 %v254, %v253
      %v265 = vpack.c.b16 %v256, %v255
      %v266 = vpack.c.b16 %v258, %v257
      %275 = vmatpush.bf16.msra.mxu0 %v266
      %276 = vmatpush.bf16.msra.mxu0 %v265
      %277 = vmatpush.bf16.msra.mxu0 %v264
      %278 = vmatpush.bf16.msra.mxu0 %v263
      %279 = vmatpush.bf16.msra.mxu0 %v262
      %280 = vmatpush.bf16.msra.mxu0 %v261
      %281 = vmatpush.bf16.msra.mxu0 %v260
      %282 = vmatpush.bf16.msra.mxu0 %v259
      %283 = vmatmul.bf16.gmra.mxu0 %v211
      %v284 = vpop.f32.mrf.mxu0
      %v285 = vadd.f32 0.0, %v284
      %v286 = vpop.f32.mrf.mxu0
      %v287 = vadd.f32 0.0, %v286
      %288 = vmatmul.bf16.gmra.mxu0 %v212
      %v289 = vpop.f32.mrf.mxu0
      %v290 = vadd.f32 0.0, %v289
      %v291 = vpop.f32.mrf.mxu0
      %v292 = vadd.f32 0.0, %v291
      %293 = vmatmul.bf16.gmra.mxu0 %v213
      %v294 = vpop.f32.mrf.mxu0
      %v295 = vadd.f32 0.0, %v294
      %v296 = vpop.f32.mrf.mxu0
      %v297 = vadd.f32 0.0, %v296
      %298 = vmatmul.bf16.gmra.mxu0 %v214
      %v299 = vpop.f32.mrf.mxu0
      %v300 = vadd.f32 0.0, %v299
      %v301 = vpop.f32.mrf.mxu0
      %v302 = vadd.f32 0.0, %v301
      %303 = vmatmul.bf16.gmra.mxu0 %v215
      %v304 = vpop.f32.mrf.mxu0
      %v305 = vadd.f32 0.0, %v304
      %v306 = vpop.f32.mrf.mxu0
      %v307 = vadd.f32 0.0, %v306
      %308 = vmatmul.bf16.gmra.mxu0 %v216
      %v309 = vpop.f32.mrf.mxu0
      %v310 = vadd.f32 0.0, %v309
      %v311 = vpop.f32.mrf.mxu0
      %v312 = vadd.f32 0.0, %v311
      %313 = vmatmul.bf16.gmra.mxu0 %v217
      %v314 = vpop.f32.mrf.mxu0
      %v315 = vadd.f32 0.0, %v314
      %v316 = vpop.f32.mrf.mxu0
      %v317 = vadd.f32 0.0, %v316
      %318 = vmatmul.bf16.gmra.mxu0 %v218
      %v319 = vpop.f32.mrf.mxu0
      %v320 = vadd.f32 0.0, %v319
      %v321 = vpop.f32.mrf.mxu0
      %v322 = vadd.f32 0.0, %v321
      %323 = vdwg.mxu0
      %v324 = vpack.c.bf16 %v285, %v285
      %v325 = vpack.c.bf16 %v287, %v287
      %v326 = vpack.c.bf16 %v290, %v290
      %v327 = vpack.c.bf16 %v292, %v292
      %v328 = vpack.c.bf16 %v295, %v295
      %v329 = vpack.c.bf16 %v297, %v297
      %v330 = vpack.c.bf16 %v300, %v300
      %v331 = vpack.c.bf16 %v302, %v302
      %v332 = vpack.c.bf16 %v305, %v305
      %v333 = vpack.c.bf16 %v307, %v307
      %v334 = vpack.c.bf16 %v310, %v310
      %v335 = vpack.c.bf16 %v312, %v312
      %v336 = vpack.c.bf16 %v315, %v315
      %v337 = vpack.c.bf16 %v317, %v317
      %v338 = vpack.c.bf16 %v320, %v320
      %v339 = vpack.c.bf16 %v322, %v322
      %340 = vst [vmem:[%s145] sm:$0xf] %v324
      %341 = vst [vmem:[%s145 + $0x4] sm:$0xf] %v325
      %342 = vst [vmem:[%s145 + $0x8] sm:$0xf] %v326
      %343 = vst [vmem:[%s145 + $0xc] sm:$0xf] %v327
      %344 = vst [vmem:[%s145 + $0x10] sm:$0xf] %v328
      %345 = vst [vmem:[%s145 + $0x14] sm:$0xf] %v329
      %346 = vst [vmem:[%s145 + $0x18] sm:$0xf] %v330
      %347 = vst [vmem:[%s145 + $0x1c] sm:$0xf] %v331
      %348 = vst [vmem:[%s145 + $0x20] sm:$0xf] %v332
      %349 = vst [vmem:[%s145 + $0x24] sm:$0xf] %v333
      %350 = vst [vmem:[%s145 + $0x28] sm:$0xf] %v334
      %351 = vst [vmem:[%s145 + $0x2c] sm:$0xf] %v335
      %352 = vst [vmem:[%s145 + $0x30] sm:$0xf] %v336
      %353 = vst [vmem:[%s145 + $0x34] sm:$0xf] %v337
      %354 = vst [vmem:[%s145 + $0x38] sm:$0xf] %v338
      %355 = vst [vmem:[%s145 + $0x3c] sm:$0xf] %v339
      %s356 = smul.u32 16, %s13
      %p357 = scmp.lt.s32.totalorder %s356, 47
      %s358 = scalar_select %p357, %s356, 47
      %s359 = smul.addr %s358, 4
      %s360 = scalar_lea.vmem %s2, %s359
      // Predicated region
      $region29: #{gnn_forward.4} parent=27 // pred_check
        %p361 = pneg %p78
      $region30: #{gnn_forward.4} parent=27 // pred_check_branch
        %363 = sbr.rel (%p361) target = $region32
      $region31: #{gnn_forward.4} parent=27 // pred_region
        %s364 = smul.u32 16, %s13
      $region32: #{gnn_forward.4} parent=27 // pred_fallthru
        _
    $region28: #{gnn_forward.4} parent=5 // pred_fallthru
      _
    %p365 = scmp.le.s32.totalorder 2, %s8
    // Predicated region
    $region33: #{gnn_forward.4} parent=5 // pred_check
      %p366 = pneg %p365
    $region34: #{gnn_forward.4} parent=5 // pred_check_branch
      %368 = sbr.rel (%p366) target = $region36
    $region35: #{gnn_forward.4} parent=5 // pred_region
      %s369 = ssub.s32 %s8, 2
      // Predicated region
      $region37: #{gnn_forward.4} parent=35 // pred_check
        %p370 = pneg %p84
      $region38: #{gnn_forward.4} parent=35 // pred_check_branch
        %372 = sbr.rel (%p370) target = $region40
      $region39: #{gnn_forward.4} parent=35 // pred_region
        %s373 = smul.u32 16, %s14
        %p374 = scmp.lt.s32.totalorder %s373, 47
        %s375 = scalar_select %p374, %s373, 47
        %s376 = smul.addr %s375, 4
        %s377 = scalar_lea.vmem %s2, %s376
      $region40: #{gnn_forward.4} parent=35 // pred_fallthru
        _
    $region36: #{gnn_forward.4} parent=5 // pred_fallthru
      _
  $region6: #{gnn_forward.4} parent=0 // loop_footer
    %s12 = sadd.s32 1, %s8
  $region7: #{gnn_forward.4} parent=0 // loop_footer_branch
    %7 = sbr.rel target = $region3
  $region8: #{gnn_forward.4} parent=0 // loop_exit
    _

// kernel: gnn_forward.7
$region0: #{gnn_forward.7}
  #allocation0 [shape = 'u32[]', space=smem, size = 0x4, offset = 0x4, fixed_abs, tag = 'smem constant byte address 0x4 - core index']
  #allocation1 [shape = 'u32[72,128]{1,0:T(1,128)}', space=vmem, size = 0x9000, scoped, tag = 'internal scratch']
  #allocation2 [shape = 'f32[128,128]{1,0:T(8,128)}', space=vmem, size = 0x10000, scoped, tag = 'scratch operand']
  %s0 = inlined_call_operand.vmem [shape: bf16[384,384], index: 0, kind: input, shape index: {}]
  %s1 = inlined_call_operand.vmem [shape: bf16[384,128], index: 1, kind: input, shape index: {}]
  %s2 = inlined_call_operand.vmem [shape: f32[1,128], index: 2, kind: input, shape index: {}]
  %s3 = inlined_call_operand.vmem [shape: f32[384,128], index: 3, kind: output, shape index: {}]
  %s4 = sld [smem:[#allocation0]]
  $region94: #{gnn_forward.7} parent=0
    _
  %s6 = ssub.s32 1, %s4
  %s7 = scalar_select 0, %s6, %s4
  $region1: #{gnn_forward.7} parent=0
    #allocation3 [shape = 'u8[65536]{0}', space=vmem, size = 0x10000, scoped, tag = 'input window, operand 0']
    loop: start=0, step=1, limit=11
    $region2: #{gnn_forward.7} parent=1 // loop_pre_header
      _
    $region3: #{gnn_forward.7} parent=1 // loop_header
      %s9 = sphi 0, %s13
      %p10 = scmp.ge.s32.totalorder %s9, 11
      %s16 = sphi 0, %s28
      %s17 = sphi 0, %s24
      %s18 = sphi 0, %s16
      %s19 = sphi 0, %s17
      %s20 = sphi 0, %s18
      %s21 = sphi 0, %s19
      %s33 = sphi 0, %s35
      %s36 = sphi 0, %s33
      %s37 = sphi 0, %s36
      %s53 = sphi 0, %s37
      %s59 = sphi 0, %s61
      %s62 = sphi 0, %s59
      %s63 = sphi 0, %s62
      %s79 = sphi 0, %s63
      %s83 = sphi 0, %s83
      %s85 = sphi 0, %s83
      %s86 = sphi 0, %s85
      %s100 = sphi 0, %s86
      %s106 = sphi 0, %s108
      %s109 = sphi 0, %s106
      %s110 = sphi 0, %s109
      %s126 = sphi 0, %s110
    $region4: #{gnn_forward.7} parent=1 // loop_header_branch
      %12 = sbr.rel (%p10) target = $region8
    $region5: #{gnn_forward.7} parent=1 // loop_body
      %s14 = ssub.s32 %s9, 1
      %s15 = ssub.s32 %s9, 2
      %s22 = sadd.s32 1, %s17
      %p23 = scmp.ge.s32.totalorder %s22, 3
      %s24 = scalar_select %p23, 0, %s22
      %s25 = sadd.s32 1, %s16
      %s26 = scalar_select %p23, %s25, %s16
      %p27 = scmp.ge.s32.totalorder %s26, 3
      %s28 = scalar_select %p27, 0, %s26
      %s29 = ssub.s32 %s16, %s28
      %s30 = ssub.s32 %s17, %s24
      %s31 = sor.u32 %s29, %s30
      %p32 = scmp.eq.s32.totalorder %s31, 0
      %s34 = sadd.s32 %s33, 1
      %s35 = scalar_select %p32, %s33, %s34
      %p38 = pneg %p32
      %p39 = scmp.eq.s32.totalorder %s9, 8
      %p40 = por %p38, %p39
      %p41 = scmp.ne.s32.totalorder %s33, %s36
      %p42 = scmp.eq.s32.totalorder %s9, 0
      %p43 = por %p41, %p42
      %p44 = scmp.ne.s32.totalorder %s33, %s36
      %p45 = scmp.eq.s32.totalorder %s14, 8
      %p46 = por %p44, %p45
      %p47 = scmp.ne.s32.totalorder %s36, %s37
      %p48 = scmp.eq.s32.totalorder %s14, 0
      %p49 = por %p47, %p48
      %p50 = scmp.ne.s32.totalorder %s36, %s37
      %p51 = scmp.eq.s32.totalorder %s15, 8
      %p52 = por %p50, %p51
      %p54 = scmp.ne.s32.totalorder %s37, %s53
      %p55 = scmp.eq.s32.totalorder %s15, 0
      %p56 = por %p54, %p55
      %s57 = ssub.s32 %s17, %s24
      %p58 = scmp.eq.s32.totalorder %s57, 0
      %s60 = sadd.s32 %s59, 1
      %s61 = scalar_select %p58, %s59, %s60
      %p64 = pneg %p58
      %p65 = scmp.eq.s32.totalorder %s9, 8
      %p66 = por %p64, %p65
      %p67 = scmp.ne.s32.totalorder %s59, %s62
      %p68 = scmp.eq.s32.totalorder %s9, 0
      %p69 = por %p67, %p68
      %p70 = scmp.ne.s32.totalorder %s59, %s62
      %p71 = scmp.eq.s32.totalorder %s14, 8
      %p72 = por %p70, %p71
      %p73 = scmp.ne.s32.totalorder %s62, %s63
      %p74 = scmp.eq.s32.totalorder %s14, 0
      %p75 = por %p73, %p74
      %p76 = scmp.ne.s32.totalorder %s62, %s63
      %p77 = scmp.eq.s32.totalorder %s15, 8
      %p78 = por %p76, %p77
      %p80 = scmp.ne.s32.totalorder %s63, %s79
      %p81 = scmp.eq.s32.totalorder %s15, 0
      %p82 = por %p80, %p81
      %s84 = sadd.s32 %s83, 1
      %p87 = scmp.eq.s32.totalorder %s9, 8
      %p88 = scmp.ne.s32.totalorder %s83, %s85
      %p89 = scmp.eq.s32.totalorder %s9, 0
      %p90 = por %p88, %p89
      %p91 = scmp.ne.s32.totalorder %s83, %s85
      %p92 = scmp.eq.s32.totalorder %s14, 8
      %p93 = por %p91, %p92
      %p94 = scmp.ne.s32.totalorder %s85, %s86
      %p95 = scmp.eq.s32.totalorder %s14, 0
      %p96 = por %p94, %p95
      %p97 = scmp.ne.s32.totalorder %s85, %s86
      %p98 = scmp.eq.s32.totalorder %s15, 8
      %p99 = por %p97, %p98
      %p101 = scmp.ne.s32.totalorder %s86, %s100
      %p102 = scmp.eq.s32.totalorder %s15, 0
      %p103 = por %p101, %p102
      %s104 = ssub.s32 %s16, %s28
      %p105 = scmp.eq.s32.totalorder %s104, 0
      %s107 = sadd.s32 %s106, 1
      %s108 = scalar_select %p105, %s106, %s107
      %p111 = pneg %p105
      %p112 = scmp.eq.s32.totalorder %s9, 8
      %p113 = por %p111, %p112
      %p114 = scmp.ne.s32.totalorder %s106, %s109
      %p115 = scmp.eq.s32.totalorder %s9, 0
      %p116 = por %p114, %p115
      %p117 = scmp.ne.s32.totalorder %s106, %s109
      %p118 = scmp.eq.s32.totalorder %s14, 8
      %p119 = por %p117, %p118
      %p120 = scmp.ne.s32.totalorder %s109, %s110
      %p121 = scmp.eq.s32.totalorder %s14, 0
      %p122 = por %p120, %p121
      %p123 = scmp.ne.s32.totalorder %s109, %s110
      %p124 = scmp.eq.s32.totalorder %s15, 8
      %p125 = por %p123, %p124
      %p127 = scmp.ne.s32.totalorder %s110, %s126
      %p128 = scmp.eq.s32.totalorder %s15, 0
      %p129 = por %p127, %p128
      %p130 = scmp.le.s32.totalorder 1, %s9
      %p131 = scmp.lt.s32.totalorder %s9, 10
      %p132 = pnand %p130, %p131
      %p133 = pneg %p132
      // Predicated region
      $region9: #{gnn_forward.7} parent=5 // pred_check
        _
      $region10: #{gnn_forward.7} parent=5 // pred_check_branch
        %135 = sbr.rel (%p132) target = $region12
      $region11: #{gnn_forward.7} parent=5 // pred_region
        %s136 = ssub.s32 %s9, 1
        // Predicated region
        $region13: #{gnn_forward.7} parent=11 // pred_check
          %p137 = pneg %p96
        $region14: #{gnn_forward.7} parent=11 // pred_check_branch
          %139 = sbr.rel (%p137) target = $region16
        $region15: #{gnn_forward.7} parent=11 // pred_region
          _
        $region16: #{gnn_forward.7} parent=11 // pred_fallthru
          _
      $region12: #{gnn_forward.7} parent=5 // pred_fallthru
        _
      %p140 = scmp.lt.s32.totalorder %s9, 9
      // Predicated region
      $region17: #{gnn_forward.7} parent=5 // pred_check
        %p141 = pneg %p140
      $region18: #{gnn_forward.7} parent=5 // pred_check_branch
        %143 = sbr.rel (%p141) target = $region20
      $region19: #{gnn_forward.7} parent=5 // pred_region
        // Predicated region
        $region21: #{gnn_forward.7} parent=19 // pred_check
          %p144 = pneg %p43
        $region22: #{gnn_forward.7} parent=19 // pred_check_branch
          %146 = sbr.rel (%p144) target = $region24
        $region23: #{gnn_forward.7} parent=19 // pred_region
          %s147 = sand.u32 %s33, 1
          %s148 = sand.u32 %s33, 1
          %s149 = smul.addr %s148, 64
          %s150 = scalar_lea.vmem [#allocation3], %s149
          %s151 = smul.u32 16, %s16
          %s152 = smul.addr %s151, 3
          %s153 = sadd.s32 %s17, %s152
          %s154 = smul.addr %s153, 4
          %s155 = scalar_lea.vmem %s0, %s154
          // Predicated region
          $region25: #{gnn_forward.7} parent=23 // pred_check
            _
          $region26: #{gnn_forward.7} parent=23 // pred_check_branch
            %157 = sbr.rel (0) target = $region28
          $region27: #{gnn_forward.7} parent=23 // pred_region
            // Predicated region
            $region29: #{gnn_forward.7} parent=27 // pred_check
              _
            $region30: #{gnn_forward.7} parent=27 // pred_check_branch
              %159 = sbr.rel target = $region32
            $region31: #{gnn_forward.7} parent=27 // pred_region
              // Predicated region
              $region44: #{gnn_forward.7} parent=31 // pred_check
                _
              $region45: #{gnn_forward.7} parent=31 // pred_check_branch
                %205 = sbr.rel (0) target = $region47
              $region46: #{gnn_forward.7} parent=31 // pred_region
                loop: start=0, step=1, limit=1
                $region48: #{gnn_forward.7} parent=46 // loop_pre_header
                  _
                $region49: #{gnn_forward.7} parent=46 // loop_header
                  %s207 = sphi 0, %s211
                  %p208 = scmp.ge.s32.totalorder %s207, 1
                  %s212 = sphi %s155, %s155
                  %s213 = sphi %s150, %s150
                $region50: #{gnn_forward.7} parent=46 // loop_header_branch
                  %210 = sbr.rel (%p208) target = $region54
                $region51: #{gnn_forward.7} parent=46 // loop_body
                  _
                $region52: #{gnn_forward.7} parent=46 // loop_footer
                  %s211 = sadd.s32 1, %s207
                $region53: #{gnn_forward.7} parent=46 // loop_footer_branch
                  %206 = sbr.rel target = $region49
                $region54: #{gnn_forward.7} parent=46 // loop_exit
                  _
                %s215 = ssub.s32 16, 1
                loop: start=0, step=1, limit=1
                $region55: #{gnn_forward.7} parent=46 // loop_pre_header
                  _
                $region56: #{gnn_forward.7} parent=46 // loop_header
                  %s217 = sphi 0, %s221
                  %p218 = scmp.ge.s32.totalorder %s217, 1
                  %s222 = sphi %s155, %s155
                  %s223 = sphi %s150, %s150
                $region57: #{gnn_forward.7} parent=46 // loop_header_branch
                  %220 = sbr.rel (%p218) target = $region61
                $region58: #{gnn_forward.7} parent=46 // loop_body
                  %v224 = vld [vmem:[%s222] sm:%s215]
                  %225 = vst [vmem:[%s223] sm:%s215] %v224
                  %v226 = vld [vmem:[%s222 + $0xc] sm:%s215]
                  %227 = vst [vmem:[%s223 + $0x4] sm:%s215] %v226
                  %v228 = vld [vmem:[%s222 + $0x18] sm:%s215]
                  %229 = vst [vmem:[%s223 + $0x8] sm:%s215] %v228
                  %v230 = vld [vmem:[%s222 + $0x24] sm:%s215]
                  %231 = vst [vmem:[%s223 + $0xc] sm:%s215] %v230
                  %v232 = vld [vmem:[%s222 + $0x30] sm:%s215]
                  %233 = vst [vmem:[%s223 + $0x10] sm:%s215] %v232
                  %v234 = vld [vmem:[%s222 + $0x3c] sm:%s215]
                  %235 = vst [vmem:[%s223 + $0x14] sm:%s215] %v234
                  %v236 = vld [vmem:[%s222 + $0x48] sm:%s215]
                  %237 = vst [vmem:[%s223 + $0x18] sm:%s215] %v236
                  %v238 = vld [vmem:[%s222 + $0x54] sm:%s215]
                  %239 = vst [vmem:[%s223 + $0x1c] sm:%s215] %v238
                  %v240 = vld [vmem:[%s222 + $0x60] sm:%s215]
                  %241 = vst [vmem:[%s223 + $0x20] sm:%s215] %v240
                  %v242 = vld [vmem:[%s222 + $0x6c] sm:%s215]
                  %243 = vst [vmem:[%s223 + $0x24] sm:%s215] %v242
                  %v244 = vld [vmem:[%s222 + $0x78] sm:%s215]
                  %245 = vst [vmem:[%s223 + $0x28] sm:%s215] %v244
                  %v246 = vld [vmem:[%s222 + $0x84] sm:%s215]
                  %247 = vst [vmem:[%s223 + $0x2c] sm:%s215] %v246
                  %v248 = vld [vmem:[%s222 + $0x90] sm:%s215]
                  %249 = vst [vmem:[%s223 + $0x30] sm:%s215] %v248
                  %v250 = vld [vmem:[%s222 + $0x9c] sm:%s215]
                  %251 = vst [vmem:[%s223 + $0x34] sm:%s215] %v250
                  %v252 = vld [vmem:[%s222 + $0xa8] sm:%s215]
                  %253 = vst [vmem:[%s223 + $0x38] sm:%s215] %v252
                  %v254 = vld [vmem:[%s222 + $0xb4] sm:%s215]
                  %255 = vst [vmem:[%s223 + $0x3c] sm:%s215] %v254
                $region59: #{gnn_forward.7} parent=46 // loop_footer
                  %s221 = sadd.s32 1, %s217
                $region60: #{gnn_forward.7} parent=46 // loop_footer_branch
                  %216 = sbr.rel target = $region56
                $region61: #{gnn_forward.7} parent=46 // loop_exit
                  _
              $region47: #{gnn_forward.7} parent=31 // pred_fallthru
                _
            $region32: #{gnn_forward.7} parent=27 // pred_fallthru
              _
            // Predicated region
            $region33: #{gnn_forward.7} parent=27 // pred_check
              _
            $region34: #{gnn_forward.7} parent=27 // pred_check_branch
              %161 = sbr.rel (0) target = $region36
            $region35: #{gnn_forward.7} parent=27 // pred_region
              %s163 = ssub.s32 16, 1
              loop: start=0, step=1, limit=1
              $region37: #{gnn_forward.7} parent=35 // loop_pre_header
                _
              $region38: #{gnn_forward.7} parent=35 // loop_header
                %s165 = sphi 0, %s169
                %p166 = scmp.ge.s32.totalorder %s165, 1
                %s170 = sphi %s155, %s155
                %s171 = sphi %s150, %s150
              $region39: #{gnn_forward.7} parent=35 // loop_header_branch
                %168 = sbr.rel (%p166) target = $region43
              $region40: #{gnn_forward.7} parent=35 // loop_body
                %v172 = vld [vmem:[%s170] sm:%s163]
                %173 = vst [vmem:[%s171] sm:%s163] %v172
                %v174 = vld [vmem:[%s170 + $0xc] sm:%s163]
                %175 = vst [vmem:[%s171 + $0x4] sm:%s163] %v174
                %v176 = vld [vmem:[%s170 + $0x18] sm:%s163]
                %177 = vst [vmem:[%s171 + $0x8] sm:%s163] %v176
                %v178 = vld [vmem:[%s170 + $0x24] sm:%s163]
                %179 = vst [vmem:[%s171 + $0xc] sm:%s163] %v178
                %v180 = vld [vmem:[%s170 + $0x30] sm:%s163]
                %181 = vst [vmem:[%s171 + $0x10] sm:%s163] %v180
                %v182 = vld [vmem:[%s170 + $0x3c] sm:%s163]
                %183 = vst [vmem:[%s171 + $0x14] sm:%s163] %v182
                %v184 = vld [vmem:[%s170 + $0x48] sm:%s163]
                %185 = vst [vmem:[%s171 + $0x18] sm:%s163] %v184
                %v186 = vld [vmem:[%s170 + $0x54] sm:%s163]
                %187 = vst [vmem:[%s171 + $0x1c] sm:%s163] %v186
                %v188 = vld [vmem:[%s170 + $0x60] sm:%s163]
                %189 = vst [vmem:[%s171 + $0x20] sm:%s163] %v188
                %v190 = vld [vmem:[%s170 + $0x6c] sm:%s163]
                %191 = vst [vmem:[%s171 + $0x24] sm:%s163] %v190
                %v192 = vld [vmem:[%s170 + $0x78] sm:%s163]
                %193 = vst [vmem:[%s171 + $0x28] sm:%s163] %v192
                %v194 = vld [vmem:[%s170 + $0x84] sm:%s163]
                %195 = vst [vmem:[%s171 + $0x2c] sm:%s163] %v194
                %v196 = vld [vmem:[%s170 + $0x90] sm:%s163]
                %197 = vst [vmem:[%s171 + $0x30] sm:%s163] %v196
                %v198 = vld [vmem:[%s170 + $0x9c] sm:%s163]
                %199 = vst [vmem:[%s171 + $0x34] sm:%s163] %v198
                %v200 = vld [vmem:[%s170 + $0xa8] sm:%s163]
                %201 = vst [vmem:[%s171 + $0x38] sm:%s163] %v200
                %v202 = vld [vmem:[%s170 + $0xb4] sm:%s163]
                %203 = vst [vmem:[%s171 + $0x3c] sm:%s163] %v202
              $region41: #{gnn_forward.7} parent=35 // loop_footer
                %s169 = sadd.s32 1, %s165
              $region42: #{gnn_forward.7} parent=35 // loop_footer_branch
                %164 = sbr.rel target = $region38
              $region43: #{gnn_forward.7} parent=35 // loop_exit
                _
            $region36: #{gnn_forward.7} parent=27 // pred_fallthru
              _
          $region28: #{gnn_forward.7} parent=23 // pred_fallthru
            _
          %256 = vnop
        $region24: #{gnn_forward.7} parent=19 // pred_fallthru
          _
        // Predicated region
        $region62: #{gnn_forward.7} parent=19 // pred_check
          %p257 = pneg %p69
        $region63: #{gnn_forward.7} parent=19 // pred_check_branch
          %259 = sbr.rel (%p257) target = $region65
        $region64: #{gnn_forward.7} parent=19 // pred_region
          %s260 = smul.u32 16, %s17
          %p261 = scmp.lt.s32.totalorder %s260, 47
          %s262 = scalar_select %p261, %s260, 47
          %s263 = smul.addr %s262, 4
          %s264 = scalar_lea.vmem %s1, %s263
          %s265 = smul.u32 16, %s17
        $region65: #{gnn_forward.7} parent=19 // pred_fallthru
          _
      $region20: #{gnn_forward.7} parent=5 // pred_fallthru
        _
      %p266 = scmp.le.s32.totalorder 1, %s9
      %p267 = scmp.lt.s32.totalorder %s9, 10
      %p268 = pnand %p266, %p267
      %p269 = pneg %p268
      // Predicated region
      $region66: #{gnn_forward.7} parent=5 // pred_check
        _
      $region67: #{gnn_forward.7} parent=5 // pred_check_branch
        %271 = sbr.rel (%p268) target = $region69
      $region68: #{gnn_forward.7} parent=5 // pred_region
        %s272 = ssub.s32 %s9, 1
        %s273 = sand.u32 %s36, 1
        %s274 = sand.u32 %s36, 1
        %s275 = smul.addr %s274, 64
        %s276 = scalar_lea.vmem [#allocation3], %s275
        // Predicated region
        $region70: #{gnn_forward.7} parent=68 // pred_check
          %p277 = pneg %p49
        $region71: #{gnn_forward.7} parent=68 // pred_check_branch
          %279 = sbr.rel (%p277) target = $region73
        $region72: #{gnn_forward.7} parent=68 // pred_region
          _
        $region73: #{gnn_forward.7} parent=68 // pred_fallthru
          _
        %s280 = sand.u32 %s36, 1
        %s281 = sand.u32 %s36, 1
        %s282 = smul.addr %s281, 64
        %s283 = scalar_lea.vmem [#allocation3], %s282
        %p284 = pneg %p49
        %p285 = pneg %p46
        %s286 = smul.u32 16, %s19
        %p287 = scmp.lt.s32.totalorder %s286, 47
        %s288 = scalar_select %p287, %s286, 47
        %s289 = smul.addr %s288, 4
        %s290 = scalar_lea.vmem %s1, %s289
        %p291 = pneg %p75
        %p292 = pneg %p72
        %p293 = pneg %p96
        %p294 = pneg %p93
        %p295 = pneg %p122
        %p296 = pneg %p119
        %s297 = smul.u32 16, %s18
        %p298 = scmp.lt.s32.totalorder %s297, 47
        %s299 = scalar_select %p298, %s297, 47
        %s300 = smul.addr %s299, 8
        %s301 = scalar_lea.vmem %s3, %s300
        %s302 = smul.u32 16, %s18
        %s303 = smul.u32 16, %s19
        %p304 = scmp.lt.s32.totalorder %s303, 47
        %s305 = scalar_select %p304, %s303, 47
        %s306 = smul.addr %s305, 4
        %s307 = scalar_lea.vmem %s1, %s306
        %s308 = smul.u32 16, %s19
        %s309 = smul.u32 16, %s18
        %p310 = scmp.lt.s32.totalorder %s309, 47
        %s311 = scalar_select %p310, %s309, 47
        %s312 = smul.addr %s311, 8
        %s313 = scalar_lea.vmem %s3, %s312
        %s314 = smul.u32 16, %s18
        %p315 = scmp.eq.s32.totalorder %s19, 0
        // Predicated region
        $region74: #{gnn_forward.7} parent=68 // pred_check
          %p316 = pneg %p315
        $region75: #{gnn_forward.7} parent=68 // pred_check_branch
          %318 = sbr.rel (%p316) target = $region77
        $region76: #{gnn_forward.7} parent=68 // pred_region
          %319 = vst [vmem:[#allocation2] sm:$0xff] 0.0
          %320 = vst [vmem:[#allocation2 + $0x8] sm:$0xff] 0.0
          %321 = vst [vmem:[#allocation2 + $0x10] sm:$0xff] 0.0
          %322 = vst [vmem:[#allocation2 + $0x18] sm:$0xff] 0.0
          %323 = vst [vmem:[#allocation2 + $0x20] sm:$0xff] 0.0
          %324 = vst [vmem:[#allocation2 + $0x28] sm:$0xff] 0.0
          %325 = vst [vmem:[#allocation2 + $0x30] sm:$0xff] 0.0
          %326 = vst [vmem:[#allocation2 + $0x38] sm:$0xff] 0.0
          %327 = vst [vmem:[#allocation2 + $0x40] sm:$0xff] 0.0
          %328 = vst [vmem:[#allocation2 + $0x48] sm:$0xff] 0.0
          %329 = vst [vmem:[#allocation2 + $0x50] sm:$0xff] 0.0
          %330 = vst [vmem:[#allocation2 + $0x58] sm:$0xff] 0.0
          %331 = vst [vmem:[#allocation2 + $0x60] sm:$0xff] 0.0
          %332 = vst [vmem:[#allocation2 + $0x68] sm:$0xff] 0.0
          %333 = vst [vmem:[#allocation2 + $0x70] sm:$0xff] 0.0
          %334 = vst [vmem:[#allocation2 + $0x78] sm:$0xff] 0.0
        $region77: #{gnn_forward.7} parent=68 // pred_fallthru
          _
        %v335 = vld [vmem:[#allocation2] sm:$0xff]
        %v336 = vld [vmem:[#allocation2 + $0x8] sm:$0xff]
        %v337 = vld [vmem:[#allocation2 + $0x10] sm:$0xff]
        %v338 = vld [vmem:[#allocation2 + $0x18] sm:$0xff]
        %v339 = vld [vmem:[#allocation2 + $0x20] sm:$0xff]
        %v340 = vld [vmem:[#allocation2 + $0x28] sm:$0xff]
        %v341 = vld [vmem:[#allocation2 + $0x30] sm:$0xff]
        %v342 = vld [vmem:[#allocation2 + $0x38] sm:$0xff]
        %v343 = vld [vmem:[#allocation2 + $0x40] sm:$0xff]
        %v344 = vld [vmem:[#allocation2 + $0x48] sm:$0xff]
        %v345 = vld [vmem:[#allocation2 + $0x50] sm:$0xff]
        %v346 = vld [vmem:[#allocation2 + $0x58] sm:$0xff]
        %v347 = vld [vmem:[#allocation2 + $0x60] sm:$0xff]
        %v348 = vld [vmem:[#allocation2 + $0x68] sm:$0xff]
        %v349 = vld [vmem:[#allocation2 + $0x70] sm:$0xff]
        %v350 = vld [vmem:[#allocation2 + $0x78] sm:$0xff]
        %v351 = vld [vmem:[%s276] sm:$0xf]
        %v352 = vld [vmem:[%s276 + $0x4] sm:$0xf]
        %v353 = vld [vmem:[%s276 + $0x8] sm:$0xf]
        %v354 = vld [vmem:[%s276 + $0xc] sm:$0xf]
        %v355 = vld [vmem:[%s276 + $0x10] sm:$0xf]
        %v356 = vld [vmem:[%s276 + $0x14] sm:$0xf]
        %v357 = vld [vmem:[%s276 + $0x18] sm:$0xf]
        %v358 = vld [vmem:[%s276 + $0x1c] sm:$0xf]
        %v359 = vld [vmem:[%s276 + $0x20] sm:$0xf]
        %v360 = vld [vmem:[%s276 + $0x24] sm:$0xf]
        %v361 = vld [vmem:[%s276 + $0x28] sm:$0xf]
        %v362 = vld [vmem:[%s276 + $0x2c] sm:$0xf]
        %v363 = vld [vmem:[%s276 + $0x30] sm:$0xf]
        %v364 = vld [vmem:[%s276 + $0x34] sm:$0xf]
        %v365 = vld [vmem:[%s276 + $0x38] sm:$0xf]
        %v366 = vld [vmem:[%s276 + $0x3c] sm:$0xf]
        %v367 = vld [vmem:[%s307] sm:$0xf]
        %v368 = vld [vmem:[%s307 + $0x4] sm:$0xf]
        %v369 = vld [vmem:[%s307 + $0x8] sm:$0xf]
        %v370 = vld [vmem:[%s307 + $0xc] sm:$0xf]
        %v371 = vld [vmem:[%s307 + $0x10] sm:$0xf]
        %v372 = vld [vmem:[%s307 + $0x14] sm:$0xf]
        %v373 = vld [vmem:[%s307 + $0x18] sm:$0xf]
        %v374 = vld [vmem:[%s307 + $0x1c] sm:$0xf]
        %v375 = vld [vmem:[%s307 + $0x20] sm:$0xf]
        %v376 = vld [vmem:[%s307 + $0x24] sm:$0xf]
        %v377 = vld [vmem:[%s307 + $0x28] sm:$0xf]
        %v378 = vld [vmem:[%s307 + $0x2c] sm:$0xf]
        %v379 = vld [vmem:[%s307 + $0x30] sm:$0xf]
        %v380 = vld [vmem:[%s307 + $0x34] sm:$0xf]
        %v381 = vld [vmem:[%s307 + $0x38] sm:$0xf]
        %v382 = vld [vmem:[%s307 + $0x3c] sm:$0xf]
        %v399 = vunpack.c.l.b16 %v351
        %v400 = vunpack.c.l.b16 %v352
        %v401 = vunpack.c.l.b16 %v353
        %v402 = vunpack.c.l.b16 %v354
        %v403 = vunpack.c.l.b16 %v355
        %v404 = vunpack.c.l.b16 %v356
        %v405 = vunpack.c.l.b16 %v357
        %v406 = vunpack.c.l.b16 %v358
        %v407 = vunpack.c.l.b16 %v359
        %v408 = vunpack.c.l.b16 %v360
        %v409 = vunpack.c.l.b16 %v361
        %v410 = vunpack.c.l.b16 %v362
        %v411 = vunpack.c.l.b16 %v363
        %v412 = vunpack.c.l.b16 %v364
        %v413 = vunpack.c.l.b16 %v365
        %v414 = vunpack.c.l.b16 %v366
        %v415 = vpack.c.b16 %v400, %v399
        %v416 = vpack.c.b16 %v402, %v401
        %v417 = vpack.c.b16 %v404, %v403
        %v418 = vpack.c.b16 %v406, %v405
        %v419 = vpack.c.b16 %v408, %v407
        %v420 = vpack.c.b16 %v410, %v409
        %v421 = vpack.c.b16 %v412, %v411
        %v422 = vpack.c.b16 %v414, %v413
        %v447 = vunpack.c.l.b16 %v367
        %v448 = vunpack.c.l.b16 %v368
        %v449 = vunpack.c.l.b16 %v369
        %v450 = vunpack.c.l.b16 %v370
        %v451 = vunpack.c.l.b16 %v371
        %v452 = vunpack.c.l.b16 %v372
        %v453 = vunpack.c.l.b16 %v373
        %v454 = vunpack.c.l.b16 %v374
        %v455 = vunpack.c.l.b16 %v375
        %v456 = vunpack.c.l.b16 %v376
        %v457 = vunpack.c.l.b16 %v377
        %v458 = vunpack.c.l.b16 %v378
        %v459 = vunpack.c.l.b16 %v379
        %v460 = vunpack.c.l.b16 %v380
        %v461 = vunpack.c.l.b16 %v381
        %v462 = vunpack.c.l.b16 %v382
        %v463 = vpack.c.b16 %v448, %v447
        %v464 = vpack.c.b16 %v450, %v449
        %v465 = vpack.c.b16 %v452, %v451
        %v466 = vpack.c.b16 %v454, %v453
        %v467 = vpack.c.b16 %v456, %v455
        %v468 = vpack.c.b16 %v458, %v457
        %v469 = vpack.c.b16 %v460, %v459
        %v470 = vpack.c.b16 %v462, %v461
        %479 = vmatpush.bf16.msra.mxu0 %v470
        %480 = vmatpush.bf16.msra.mxu0 %v469
        %481 = vmatpush.bf16.msra.mxu0 %v468
        %482 = vmatpush.bf16.msra.mxu0 %v467
        %483 = vmatpush.bf16.msra.mxu0 %v466
        %484 = vmatpush.bf16.msra.mxu0 %v465
        %485 = vmatpush.bf16.msra.mxu0 %v464
        %486 = vmatpush.bf16.msra.mxu0 %v463
        %487 = vmatmul.bf16.gmra.mxu0 %v415
        %v488 = vpop.f32.mrf.mxu0
        %v489 = vadd.f32 0.0, %v488
        %v490 = vpop.f32.mrf.mxu0
        %v491 = vadd.f32 0.0, %v490
        %492 = vmatmul.bf16.gmra.mxu0 %v416
        %v493 = vpop.f32.mrf.mxu0
        %v494 = vadd.f32 0.0, %v493
        %v495 = vpop.f32.mrf.mxu0
        %v496 = vadd.f32 0.0, %v495
        %497 = vmatmul.bf16.gmra.mxu0 %v417
        %v498 = vpop.f32.mrf.mxu0
        %v499 = vadd.f32 0.0, %v498
        %v500 = vpop.f32.mrf.mxu0
        %v501 = vadd.f32 0.0, %v500
        %502 = vmatmul.bf16.gmra.mxu0 %v418
        %v503 = vpop.f32.mrf.mxu0
        %v504 = vadd.f32 0.0, %v503
        %v505 = vpop.f32.mrf.mxu0
        %v506 = vadd.f32 0.0, %v505
        %507 = vmatmul.bf16.gmra.mxu0 %v419
        %v508 = vpop.f32.mrf.mxu0
        %v509 = vadd.f32 0.0, %v508
        %v510 = vpop.f32.mrf.mxu0
        %v511 = vadd.f32 0.0, %v510
        %512 = vmatmul.bf16.gmra.mxu0 %v420
        %v513 = vpop.f32.mrf.mxu0
        %v514 = vadd.f32 0.0, %v513
        %v515 = vpop.f32.mrf.mxu0
        %v516 = vadd.f32 0.0, %v515
        %517 = vmatmul.bf16.gmra.mxu0 %v421
        %v518 = vpop.f32.mrf.mxu0
        %v519 = vadd.f32 0.0, %v518
        %v520 = vpop.f32.mrf.mxu0
        %v521 = vadd.f32 0.0, %v520
        %522 = vmatmul.bf16.gmra.mxu0 %v422
        %v523 = vpop.f32.mrf.mxu0
        %v524 = vadd.f32 0.0, %v523
        %v525 = vpop.f32.mrf.mxu0
        %v526 = vadd.f32 0.0, %v525
        %527 = vdwg.mxu0
        %v528 = vadd.f32 %v335, %v489
        %v529 = vadd.f32 %v336, %v491
        %v530 = vadd.f32 %v337, %v494
        %v531 = vadd.f32 %v338, %v496
        %v532 = vadd.f32 %v339, %v499
        %v533 = vadd.f32 %v340, %v501
        %v534 = vadd.f32 %v341, %v504
        %v535 = vadd.f32 %v342, %v506
        %v536 = vadd.f32 %v343, %v509
        %v537 = vadd.f32 %v344, %v511
        %v538 = vadd.f32 %v345, %v514
        %v539 = vadd.f32 %v346, %v516
        %v540 = vadd.f32 %v347, %v519
        %v541 = vadd.f32 %v348, %v521
        %v542 = vadd.f32 %v349, %v524
        %v543 = vadd.f32 %v350, %v526
        %544 = vst [vmem:[#allocation2] sm:$0xff] %v528
        %545 = vst [vmem:[#allocation2 + $0x8] sm:$0xff] %v529
        %546 = vst [vmem:[#allocation2 + $0x10] sm:$0xff] %v530
        %547 = vst [vmem:[#allocation2 + $0x18] sm:$0xff] %v531
        %548 = vst [vmem:[#allocation2 + $0x20] sm:$0xff] %v532
        %549 = vst [vmem:[#allocation2 + $0x28] sm:$0xff] %v533
        %550 = vst [vmem:[#allocation2 + $0x30] sm:$0xff] %v534
        %551 = vst [vmem:[#allocation2 + $0x38] sm:$0xff] %v535
        %552 = vst [vmem:[#allocation2 + $0x40] sm:$0xff] %v536
        %553 = vst [vmem:[#allocation2 + $0x48] sm:$0xff] %v537
        %554 = vst [vmem:[#allocation2 + $0x50] sm:$0xff] %v538
        %555 = vst [vmem:[#allocation2 + $0x58] sm:$0xff] %v539
        %556 = vst [vmem:[#allocation2 + $0x60] sm:$0xff] %v540
        %557 = vst [vmem:[#allocation2 + $0x68] sm:$0xff] %v541
        %558 = vst [vmem:[#allocation2 + $0x70] sm:$0xff] %v542
        %559 = vst [vmem:[#allocation2 + $0x78] sm:$0xff] %v543
        %p560 = scmp.eq.s32.totalorder %s19, 2
        // Predicated region
        $region78: #{gnn_forward.7} parent=68 // pred_check
          %p561 = pneg %p560
        $region79: #{gnn_forward.7} parent=68 // pred_check_branch
          %563 = sbr.rel (%p561) target = $region81
        $region80: #{gnn_forward.7} parent=68 // pred_region
          %v564 = vld [vmem:[#allocation2] sm:$0xff]
          %v565 = vld [vmem:[#allocation2 + $0x8] sm:$0xff]
          %v566 = vld [vmem:[#allocation2 + $0x10] sm:$0xff]
          %v567 = vld [vmem:[#allocation2 + $0x18] sm:$0xff]
          %v568 = vld [vmem:[#allocation2 + $0x20] sm:$0xff]
          %v569 = vld [vmem:[#allocation2 + $0x28] sm:$0xff]
          %v570 = vld [vmem:[#allocation2 + $0x30] sm:$0xff]
          %v571 = vld [vmem:[#allocation2 + $0x38] sm:$0xff]
          %v572 = vld [vmem:[#allocation2 + $0x40] sm:$0xff]
          %v573 = vld [vmem:[#allocation2 + $0x48] sm:$0xff]
          %v574 = vld [vmem:[#allocation2 + $0x50] sm:$0xff]
          %v575 = vld [vmem:[#allocation2 + $0x58] sm:$0xff]
          %v576 = vld [vmem:[#allocation2 + $0x60] sm:$0xff]
          %v577 = vld [vmem:[#allocation2 + $0x68] sm:$0xff]
          %v578 = vld [vmem:[#allocation2 + $0x70] sm:$0xff]
          %v579 = vld [vmem:[#allocation2 + $0x78] sm:$0xff]
          %v580 = vld [vmem:[%s2] sm:$0x1]
          %v582 = vperm.slane %v580, 0
          %v584 = vadd.f32 %v564, %v582
          %v585 = vadd.f32 %v565, %v582
          %v586 = vadd.f32 %v566, %v582
          %v587 = vadd.f32 %v567, %v582
          %v588 = vadd.f32 %v568, %v582
          %v589 = vadd.f32 %v569, %v582
          %v590 = vadd.f32 %v570, %v582
          %v591 = vadd.f32 %v571, %v582
          %v592 = vadd.f32 %v572, %v582
          %v593 = vadd.f32 %v573, %v582
          %v594 = vadd.f32 %v574, %v582
          %v595 = vadd.f32 %v575, %v582
          %v596 = vadd.f32 %v576, %v582
          %v597 = vadd.f32 %v577, %v582
          %v598 = vadd.f32 %v578, %v582
          %v599 = vadd.f32 %v579, %v582
          %600 = vst [vmem:[%s313] sm:$0xff] %v584
          %601 = vst [vmem:[%s313 + $0x8] sm:$0xff] %v585
          %602 = vst [vmem:[%s313 + $0x10] sm:$0xff] %v586
          %603 = vst [vmem:[%s313 + $0x18] sm:$0xff] %v587
          %604 = vst [vmem:[%s313 + $0x20] sm:$0xff] %v588
          %605 = vst [vmem:[%s313 + $0x28] sm:$0xff] %v589
          %606 = vst [vmem:[%s313 + $0x30] sm:$0xff] %v590
          %607 = vst [vmem:[%s313 + $0x38] sm:$0xff] %v591
          %608 = vst [vmem:[%s313 + $0x40] sm:$0xff] %v592
          %609 = vst [vmem:[%s313 + $0x48] sm:$0xff] %v593
          %610 = vst [vmem:[%s313 + $0x50] sm:$0xff] %v594
          %611 = vst [vmem:[%s313 + $0x58] sm:$0xff] %v595
          %612 = vst [vmem:[%s313 + $0x60] sm:$0xff] %v596
          %613 = vst [vmem:[%s313 + $0x68] sm:$0xff] %v597
          %614 = vst [vmem:[%s313 + $0x70] sm:$0xff] %v598
          %615 = vst [vmem:[%s313 + $0x78] sm:$0xff] %v599
        $region81: #{gnn_forward.7} parent=68 // pred_fallthru
          _
        %s616 = smul.u32 16, %s18
        %p617 = scmp.lt.s32.totalorder %s616, 47
        %s618 = scalar_select %p617, %s616, 47
        %s619 = smul.addr %s618, 8
        %s620 = scalar_lea.vmem %s3, %s619
        // Predicated region
        $region82: #{gnn_forward.7} parent=68 // pred_check
          %p621 = pneg %p119
        $region83: #{gnn_forward.7} parent=68 // pred_check_branch
          %623 = sbr.rel (%p621) target = $region85
        $region84: #{gnn_forward.7} parent=68 // pred_region
          %s624 = smul.u32 16, %s18
        $region85: #{gnn_forward.7} parent=68 // pred_fallthru
          _
      $region69: #{gnn_forward.7} parent=5 // pred_fallthru
        _
      %p625 = scmp.le.s32.totalorder 2, %s9
      // Predicated region
      $region86: #{gnn_forward.7} parent=5 // pred_check
        %p626 = pneg %p625
      $region87: #{gnn_forward.7} parent=5 // pred_check_branch
        %628 = sbr.rel (%p626) target = $region89
      $region88: #{gnn_forward.7} parent=5 // pred_region
        %s629 = ssub.s32 %s9, 2
        // Predicated region
        $region90: #{gnn_forward.7} parent=88 // pred_check
          %p630 = pneg %p125
        $region91: #{gnn_forward.7} parent=88 // pred_check_branch
          %632 = sbr.rel (%p630) target = $region93
        $region92: #{gnn_forward.7} parent=88 // pred_region
          %s633 = smul.u32 16, %s20
          %p634 = scmp.lt.s32.totalorder %s633, 47
          %s635 = scalar_select %p634, %s633, 47
          %s636 = smul.addr %s635, 8
          %s637 = scalar_lea.vmem %s3, %s636
        $region93: #{gnn_forward.7} parent=88 // pred_fallthru
          _
      $region89: #{gnn_forward.7} parent=5 // pred_fallthru
        _
    $region6: #{gnn_forward.7} parent=1 // loop_footer
      %s13 = sadd.s32 1, %s9
    $region7: #{gnn_forward.7} parent=1 // loop_footer_branch
      %8 = sbr.rel target = $region3
    $region8: #{gnn_forward.7} parent=1 // loop_exit
      _

// kernel: gnn_forward.5
$region0: #{gnn_forward.5}
  #allocation0 [shape = 'u32[]', space=smem, size = 0x4, offset = 0x4, fixed_abs, tag = 'smem constant byte address 0x4 - core index']
  #allocation1 [shape = 'u32[72,128]{1,0:T(1,128)}', space=vmem, size = 0x9000, scoped, tag = 'internal scratch']
  #allocation2 [shape = 'f32[128,128]{1,0:T(8,128)}', space=vmem, size = 0x10000, scoped, tag = 'scratch operand']
  %s0 = inlined_call_operand.vmem [shape: bf16[384,384], index: 0, kind: input, shape index: {}]
  %s1 = inlined_call_operand.vmem [shape: bf16[384,128], index: 1, kind: input, shape index: {}]
  %s2 = inlined_call_operand.vmem [shape: f32[1,128], index: 2, kind: input, shape index: {}]
  %s3 = inlined_call_operand.vmem [shape: bf16[128,128], index: 3, kind: input, shape index: {}]
  %s4 = inlined_call_operand.vmem [shape: bf16[384,128], index: 4, kind: output, shape index: {}]
  %s5 = sld [smem:[#allocation0]]
  $region98: #{gnn_forward.5} parent=0
    _
  %s7 = ssub.s32 1, %s5
  %s8 = scalar_select 0, %s7, %s5
  $region1: #{gnn_forward.5} parent=0
    #allocation3 [shape = 'u8[65536]{0}', space=vmem, size = 0x10000, scoped, tag = 'input window, operand 0']
    loop: start=0, step=1, limit=11
    $region2: #{gnn_forward.5} parent=1 // loop_pre_header
      _
    $region3: #{gnn_forward.5} parent=1 // loop_header
      %s10 = sphi 0, %s14
      %p11 = scmp.ge.s32.totalorder %s10, 11
      %s17 = sphi 0, %s29
      %s18 = sphi 0, %s25
      %s19 = sphi 0, %s17
      %s20 = sphi 0, %s18
      %s21 = sphi 0, %s19
      %s22 = sphi 0, %s20
      %s34 = sphi 0, %s36
      %s37 = sphi 0, %s34
      %s38 = sphi 0, %s37
      %s54 = sphi 0, %s38
      %s60 = sphi 0, %s62
      %s63 = sphi 0, %s60
      %s64 = sphi 0, %s63
      %s80 = sphi 0, %s64
      %s84 = sphi 0, %s84
      %s86 = sphi 0, %s84
      %s87 = sphi 0, %s86
      %s101 = sphi 0, %s87
      %s105 = sphi 0, %s105
      %s107 = sphi 0, %s105
      %s108 = sphi 0, %s107
      %s122 = sphi 0, %s108
      %s128 = sphi 0, %s130
      %s131 = sphi 0, %s128
      %s132 = sphi 0, %s131
      %s148 = sphi 0, %s132
    $region4: #{gnn_forward.5} parent=1 // loop_header_branch
      %13 = sbr.rel (%p11) target = $region8
    $region5: #{gnn_forward.5} parent=1 // loop_body
      %s15 = ssub.s32 %s10, 1
      %s16 = ssub.s32 %s10, 2
      %s23 = sadd.s32 1, %s18
      %p24 = scmp.ge.s32.totalorder %s23, 3
      %s25 = scalar_select %p24, 0, %s23
      %s26 = sadd.s32 1, %s17
      %s27 = scalar_select %p24, %s26, %s17
      %p28 = scmp.ge.s32.totalorder %s27, 3
      %s29 = scalar_select %p28, 0, %s27
      %s30 = ssub.s32 %s17, %s29
      %s31 = ssub.s32 %s18, %s25
      %s32 = sor.u32 %s30, %s31
      %p33 = scmp.eq.s32.totalorder %s32, 0
      %s35 = sadd.s32 %s34, 1
      %s36 = scalar_select %p33, %s34, %s35
      %p39 = pneg %p33
      %p40 = scmp.eq.s32.totalorder %s10, 8
      %p41 = por %p39, %p40
      %p42 = scmp.ne.s32.totalorder %s34, %s37
      %p43 = scmp.eq.s32.totalorder %s10, 0
      %p44 = por %p42, %p43
      %p45 = scmp.ne.s32.totalorder %s34, %s37
      %p46 = scmp.eq.s32.totalorder %s15, 8
      %p47 = por %p45, %p46
      %p48 = scmp.ne.s32.totalorder %s37, %s38
      %p49 = scmp.eq.s32.totalorder %s15, 0
      %p50 = por %p48, %p49
      %p51 = scmp.ne.s32.totalorder %s37, %s38
      %p52 = scmp.eq.s32.totalorder %s16, 8
      %p53 = por %p51, %p52
      %p55 = scmp.ne.s32.totalorder %s38, %s54
      %p56 = scmp.eq.s32.totalorder %s16, 0
      %p57 = por %p55, %p56
      %s58 = ssub.s32 %s18, %s25
      %p59 = scmp.eq.s32.totalorder %s58, 0
      %s61 = sadd.s32 %s60, 1
      %s62 = scalar_select %p59, %s60, %s61
      %p65 = pneg %p59
      %p66 = scmp.eq.s32.totalorder %s10, 8
      %p67 = por %p65, %p66
      %p68 = scmp.ne.s32.totalorder %s60, %s63
      %p69 = scmp.eq.s32.totalorder %s10, 0
      %p70 = por %p68, %p69
      %p71 = scmp.ne.s32.totalorder %s60, %s63
      %p72 = scmp.eq.s32.totalorder %s15, 8
      %p73 = por %p71, %p72
      %p74 = scmp.ne.s32.totalorder %s63, %s64
      %p75 = scmp.eq.s32.totalorder %s15, 0
      %p76 = por %p74, %p75
      %p77 = scmp.ne.s32.totalorder %s63, %s64
      %p78 = scmp.eq.s32.totalorder %s16, 8
      %p79 = por %p77, %p78
      %p81 = scmp.ne.s32.totalorder %s64, %s80
      %p82 = scmp.eq.s32.totalorder %s16, 0
      %p83 = por %p81, %p82
      %s85 = sadd.s32 %s84, 1
      %p88 = scmp.eq.s32.totalorder %s10, 8
      %p89 = scmp.ne.s32.totalorder %s84, %s86
      %p90 = scmp.eq.s32.totalorder %s10, 0
      %p91 = por %p89, %p90
      %p92 = scmp.ne.s32.totalorder %s84, %s86
      %p93 = scmp.eq.s32.totalorder %s15, 8
      %p94 = por %p92, %p93
      %p95 = scmp.ne.s32.totalorder %s86, %s87
      %p96 = scmp.eq.s32.totalorder %s15, 0
      %p97 = por %p95, %p96
      %p98 = scmp.ne.s32.totalorder %s86, %s87
      %p99 = scmp.eq.s32.totalorder %s16, 8
      %p100 = por %p98, %p99
      %p102 = scmp.ne.s32.totalorder %s87, %s101
      %p103 = scmp.eq.s32.totalorder %s16, 0
      %p104 = por %p102, %p103
      %s106 = sadd.s32 %s105, 1
      %p109 = scmp.eq.s32.totalorder %s10, 8
      %p110 = scmp.ne.s32.totalorder %s105, %s107
      %p111 = scmp.eq.s32.totalorder %s10, 0
      %p112 = por %p110, %p111
      %p113 = scmp.ne.s32.totalorder %s105, %s107
      %p114 = scmp.eq.s32.totalorder %s15, 8
      %p115 = por %p113, %p114
      %p116 = scmp.ne.s32.totalorder %s107, %s108
      %p117 = scmp.eq.s32.totalorder %s15, 0
      %p118 = por %p116, %p117
      %p119 = scmp.ne.s32.totalorder %s107, %s108
      %p120 = scmp.eq.s32.totalorder %s16, 8
      %p121 = por %p119, %p120
      %p123 = scmp.ne.s32.totalorder %s108, %s122
      %p124 = scmp.eq.s32.totalorder %s16, 0
      %p125 = por %p123, %p124
      %s126 = ssub.s32 %s17, %s29
      %p127 = scmp.eq.s32.totalorder %s126, 0
      %s129 = sadd.s32 %s128, 1
      %s130 = scalar_select %p127, %s128, %s129
      %p133 = pneg %p127
      %p134 = scmp.eq.s32.totalorder %s10, 8
      %p135 = por %p133, %p134
      %p136 = scmp.ne.s32.totalorder %s128, %s131
      %p137 = scmp.eq.s32.totalorder %s10, 0
      %p138 = por %p136, %p137
      %p139 = scmp.ne.s32.totalorder %s128, %s131
      %p140 = scmp.eq.s32.totalorder %s15, 8
      %p141 = por %p139, %p140
      %p142 = scmp.ne.s32.totalorder %s131, %s132
      %p143 = scmp.eq.s32.totalorder %s15, 0
      %p144 = por %p142, %p143
      %p145 = scmp.ne.s32.totalorder %s131, %s132
      %p146 = scmp.eq.s32.totalorder %s16, 8
      %p147 = por %p145, %p146
      %p149 = scmp.ne.s32.totalorder %s132, %s148
      %p150 = scmp.eq.s32.totalorder %s16, 0
      %p151 = por %p149, %p150
      %p152 = scmp.le.s32.totalorder 1, %s10
      %p153 = scmp.lt.s32.totalorder %s10, 10
      %p154 = pnand %p152, %p153
      %p155 = pneg %p154
      // Predicated region
      $region9: #{gnn_forward.5} parent=5 // pred_check
        _
      $region10: #{gnn_forward.5} parent=5 // pred_check_branch
        %157 = sbr.rel (%p154) target = $region12
      $region11: #{gnn_forward.5} parent=5 // pred_region
        %s158 = ssub.s32 %s10, 1
        // Predicated region
        $region13: #{gnn_forward.5} parent=11 // pred_check
          %p159 = pneg %p97
        $region14: #{gnn_forward.5} parent=11 // pred_check_branch
          %161 = sbr.rel (%p159) target = $region16
        $region15: #{gnn_forward.5} parent=11 // pred_region
          _
        $region16: #{gnn_forward.5} parent=11 // pred_fallthru
          _
        // Predicated region
        $region17: #{gnn_forward.5} parent=11 // pred_check
          %p162 = pneg %p118
        $region18: #{gnn_forward.5} parent=11 // pred_check_branch
          %164 = sbr.rel (%p162) target = $region20
        $region19: #{gnn_forward.5} parent=11 // pred_region
          _
        $region20: #{gnn_forward.5} parent=11 // pred_fallthru
          _
      $region12: #{gnn_forward.5} parent=5 // pred_fallthru
        _
      %p165 = scmp.lt.s32.totalorder %s10, 9
      // Predicated region
      $region21: #{gnn_forward.5} parent=5 // pred_check
        %p166 = pneg %p165
      $region22: #{gnn_forward.5} parent=5 // pred_check_branch
        %168 = sbr.rel (%p166) target = $region24
      $region23: #{gnn_forward.5} parent=5 // pred_region
        // Predicated region
        $region25: #{gnn_forward.5} parent=23 // pred_check
          %p169 = pneg %p44
        $region26: #{gnn_forward.5} parent=23 // pred_check_branch
          %171 = sbr.rel (%p169) target = $region28
        $region27: #{gnn_forward.5} parent=23 // pred_region
          %s172 = sand.u32 %s34, 1
          %s173 = sand.u32 %s34, 1
          %s174 = smul.addr %s173, 64
          %s175 = scalar_lea.vmem [#allocation3], %s174
          %s176 = smul.u32 16, %s17
          %s177 = smul.addr %s176, 3
          %s178 = sadd.s32 %s18, %s177
          %s179 = smul.addr %s178, 4
          %s180 = scalar_lea.vmem %s0, %s179
          // Predicated region
          $region29: #{gnn_forward.5} parent=27 // pred_check
            _
          $region30: #{gnn_forward.5} parent=27 // pred_check_branch
            %182 = sbr.rel (0) target = $region32
          $region31: #{gnn_forward.5} parent=27 // pred_region
            // Predicated region
            $region33: #{gnn_forward.5} parent=31 // pred_check
              _
            $region34: #{gnn_forward.5} parent=31 // pred_check_branch
              %184 = sbr.rel target = $region36
            $region35: #{gnn_forward.5} parent=31 // pred_region
              // Predicated region
              $region48: #{gnn_forward.5} parent=35 // pred_check
                _
              $region49: #{gnn_forward.5} parent=35 // pred_check_branch
                %230 = sbr.rel (0) target = $region51
              $region50: #{gnn_forward.5} parent=35 // pred_region
                loop: start=0, step=1, limit=1
                $region52: #{gnn_forward.5} parent=50 // loop_pre_header
                  _
                $region53: #{gnn_forward.5} parent=50 // loop_header
                  %s232 = sphi 0, %s236
                  %p233 = scmp.ge.s32.totalorder %s232, 1
                  %s237 = sphi %s180, %s180
                  %s238 = sphi %s175, %s175
                $region54: #{gnn_forward.5} parent=50 // loop_header_branch
                  %235 = sbr.rel (%p233) target = $region58
                $region55: #{gnn_forward.5} parent=50 // loop_body
                  _
                $region56: #{gnn_forward.5} parent=50 // loop_footer
                  %s236 = sadd.s32 1, %s232
                $region57: #{gnn_forward.5} parent=50 // loop_footer_branch
                  %231 = sbr.rel target = $region53
                $region58: #{gnn_forward.5} parent=50 // loop_exit
                  _
                %s240 = ssub.s32 16, 1
                loop: start=0, step=1, limit=1
                $region59: #{gnn_forward.5} parent=50 // loop_pre_header
                  _
                $region60: #{gnn_forward.5} parent=50 // loop_header
                  %s242 = sphi 0, %s246
                  %p243 = scmp.ge.s32.totalorder %s242, 1
                  %s247 = sphi %s180, %s180
                  %s248 = sphi %s175, %s175
                $region61: #{gnn_forward.5} parent=50 // loop_header_branch
                  %245 = sbr.rel (%p243) target = $region65
                $region62: #{gnn_forward.5} parent=50 // loop_body
                  %v249 = vld [vmem:[%s247] sm:%s240]
                  %250 = vst [vmem:[%s248] sm:%s240] %v249
                  %v251 = vld [vmem:[%s247 + $0xc] sm:%s240]
                  %252 = vst [vmem:[%s248 + $0x4] sm:%s240] %v251
                  %v253 = vld [vmem:[%s247 + $0x18] sm:%s240]
                  %254 = vst [vmem:[%s248 + $0x8] sm:%s240] %v253
                  %v255 = vld [vmem:[%s247 + $0x24] sm:%s240]
                  %256 = vst [vmem:[%s248 + $0xc] sm:%s240] %v255
                  %v257 = vld [vmem:[%s247 + $0x30] sm:%s240]
                  %258 = vst [vmem:[%s248 + $0x10] sm:%s240] %v257
                  %v259 = vld [vmem:[%s247 + $0x3c] sm:%s240]
                  %260 = vst [vmem:[%s248 + $0x14] sm:%s240] %v259
                  %v261 = vld [vmem:[%s247 + $0x48] sm:%s240]
                  %262 = vst [vmem:[%s248 + $0x18] sm:%s240] %v261
                  %v263 = vld [vmem:[%s247 + $0x54] sm:%s240]
                  %264 = vst [vmem:[%s248 + $0x1c] sm:%s240] %v263
                  %v265 = vld [vmem:[%s247 + $0x60] sm:%s240]
                  %266 = vst [vmem:[%s248 + $0x20] sm:%s240] %v265
                  %v267 = vld [vmem:[%s247 + $0x6c] sm:%s240]
                  %268 = vst [vmem:[%s248 + $0x24] sm:%s240] %v267
                  %v269 = vld [vmem:[%s247 + $0x78] sm:%s240]
                  %270 = vst [vmem:[%s248 + $0x28] sm:%s240] %v269
                  %v271 = vld [vmem:[%s247 + $0x84] sm:%s240]
                  %272 = vst [vmem:[%s248 + $0x2c] sm:%s240] %v271
                  %v273 = vld [vmem:[%s247 + $0x90] sm:%s240]
                  %274 = vst [vmem:[%s248 + $0x30] sm:%s240] %v273
                  %v275 = vld [vmem:[%s247 + $0x9c] sm:%s240]
                  %276 = vst [vmem:[%s248 + $0x34] sm:%s240] %v275
                  %v277 = vld [vmem:[%s247 + $0xa8] sm:%s240]
                  %278 = vst [vmem:[%s248 + $0x38] sm:%s240] %v277
                  %v279 = vld [vmem:[%s247 + $0xb4] sm:%s240]
                  %280 = vst [vmem:[%s248 + $0x3c] sm:%s240] %v279
                $region63: #{gnn_forward.5} parent=50 // loop_footer
                  %s246 = sadd.s32 1, %s242
                $region64: #{gnn_forward.5} parent=50 // loop_footer_branch
                  %241 = sbr.rel target = $region60
                $region65: #{gnn_forward.5} parent=50 // loop_exit
                  _
              $region51: #{gnn_forward.5} parent=35 // pred_fallthru
                _
            $region36: #{gnn_forward.5} parent=31 // pred_fallthru
              _
            // Predicated region
            $region37: #{gnn_forward.5} parent=31 // pred_check
              _
            $region38: #{gnn_forward.5} parent=31 // pred_check_branch
              %186 = sbr.rel (0) target = $region40
            $region39: #{gnn_forward.5} parent=31 // pred_region
              %s188 = ssub.s32 16, 1
              loop: start=0, step=1, limit=1
              $region41: #{gnn_forward.5} parent=39 // loop_pre_header
                _
              $region42: #{gnn_forward.5} parent=39 // loop_header
                %s190 = sphi 0, %s194
                %p191 = scmp.ge.s32.totalorder %s190, 1
                %s195 = sphi %s180, %s180
                %s196 = sphi %s175, %s175
              $region43: #{gnn_forward.5} parent=39 // loop_header_branch
                %193 = sbr.rel (%p191) target = $region47
              $region44: #{gnn_forward.5} parent=39 // loop_body
                %v197 = vld [vmem:[%s195] sm:%s188]
                %198 = vst [vmem:[%s196] sm:%s188] %v197
                %v199 = vld [vmem:[%s195 + $0xc] sm:%s188]
                %200 = vst [vmem:[%s196 + $0x4] sm:%s188] %v199
                %v201 = vld [vmem:[%s195 + $0x18] sm:%s188]
                %202 = vst [vmem:[%s196 + $0x8] sm:%s188] %v201
                %v203 = vld [vmem:[%s195 + $0x24] sm:%s188]
                %204 = vst [vmem:[%s196 + $0xc] sm:%s188] %v203
                %v205 = vld [vmem:[%s195 + $0x30] sm:%s188]
                %206 = vst [vmem:[%s196 + $0x10] sm:%s188] %v205
                %v207 = vld [vmem:[%s195 + $0x3c] sm:%s188]
                %208 = vst [vmem:[%s196 + $0x14] sm:%s188] %v207
                %v209 = vld [vmem:[%s195 + $0x48] sm:%s188]
                %210 = vst [vmem:[%s196 + $0x18] sm:%s188] %v209
                %v211 = vld [vmem:[%s195 + $0x54] sm:%s188]
                %212 = vst [vmem:[%s196 + $0x1c] sm:%s188] %v211
                %v213 = vld [vmem:[%s195 + $0x60] sm:%s188]
                %214 = vst [vmem:[%s196 + $0x20] sm:%s188] %v213
                %v215 = vld [vmem:[%s195 + $0x6c] sm:%s188]
                %216 = vst [vmem:[%s196 + $0x24] sm:%s188] %v215
                %v217 = vld [vmem:[%s195 + $0x78] sm:%s188]
                %218 = vst [vmem:[%s196 + $0x28] sm:%s188] %v217
                %v219 = vld [vmem:[%s195 + $0x84] sm:%s188]
                %220 = vst [vmem:[%s196 + $0x2c] sm:%s188] %v219
                %v221 = vld [vmem:[%s195 + $0x90] sm:%s188]
                %222 = vst [vmem:[%s196 + $0x30] sm:%s188] %v221
                %v223 = vld [vmem:[%s195 + $0x9c] sm:%s188]
                %224 = vst [vmem:[%s196 + $0x34] sm:%s188] %v223
                %v225 = vld [vmem:[%s195 + $0xa8] sm:%s188]
                %226 = vst [vmem:[%s196 + $0x38] sm:%s188] %v225
                %v227 = vld [vmem:[%s195 + $0xb4] sm:%s188]
                %228 = vst [vmem:[%s196 + $0x3c] sm:%s188] %v227
              $region45: #{gnn_forward.5} parent=39 // loop_footer
                %s194 = sadd.s32 1, %s190
              $region46: #{gnn_forward.5} parent=39 // loop_footer_branch
                %189 = sbr.rel target = $region42
              $region47: #{gnn_forward.5} parent=39 // loop_exit
                _
            $region40: #{gnn_forward.5} parent=31 // pred_fallthru
              _
          $region32: #{gnn_forward.5} parent=27 // pred_fallthru
            _
          %281 = vnop
        $region28: #{gnn_forward.5} parent=23 // pred_fallthru
          _
        // Predicated region
        $region66: #{gnn_forward.5} parent=23 // pred_check
          %p282 = pneg %p70
        $region67: #{gnn_forward.5} parent=23 // pred_check_branch
          %284 = sbr.rel (%p282) target = $region69
        $region68: #{gnn_forward.5} parent=23 // pred_region
          %s285 = smul.u32 16, %s18
          %p286 = scmp.lt.s32.totalorder %s285, 47
          %s287 = scalar_select %p286, %s285, 47
          %s288 = smul.addr %s287, 4
          %s289 = scalar_lea.vmem %s1, %s288
          %s290 = smul.u32 16, %s18
        $region69: #{gnn_forward.5} parent=23 // pred_fallthru
          _
      $region24: #{gnn_forward.5} parent=5 // pred_fallthru
        _
      %p291 = scmp.le.s32.totalorder 1, %s10
      %p292 = scmp.lt.s32.totalorder %s10, 10
      %p293 = pnand %p291, %p292
      %p294 = pneg %p293
      // Predicated region
      $region70: #{gnn_forward.5} parent=5 // pred_check
        _
      $region71: #{gnn_forward.5} parent=5 // pred_check_branch
        %296 = sbr.rel (%p293) target = $region73
      $region72: #{gnn_forward.5} parent=5 // pred_region
        %s297 = ssub.s32 %s10, 1
        %s298 = sand.u32 %s37, 1
        %s299 = sand.u32 %s37, 1
        %s300 = smul.addr %s299, 64
        %s301 = scalar_lea.vmem [#allocation3], %s300
        // Predicated region
        $region74: #{gnn_forward.5} parent=72 // pred_check
          %p302 = pneg %p50
        $region75: #{gnn_forward.5} parent=72 // pred_check_branch
          %304 = sbr.rel (%p302) target = $region77
        $region76: #{gnn_forward.5} parent=72 // pred_region
          _
        $region77: #{gnn_forward.5} parent=72 // pred_fallthru
          _
        %s305 = sand.u32 %s37, 1
        %s306 = sand.u32 %s37, 1
        %s307 = smul.addr %s306, 64
        %s308 = scalar_lea.vmem [#allocation3], %s307
        %p309 = pneg %p50
        %p310 = pneg %p47
        %s311 = smul.u32 16, %s20
        %p312 = scmp.lt.s32.totalorder %s311, 47
        %s313 = scalar_select %p312, %s311, 47
        %s314 = smul.addr %s313, 4
        %s315 = scalar_lea.vmem %s1, %s314
        %p316 = pneg %p76
        %p317 = pneg %p73
        %p318 = pneg %p97
        %p319 = pneg %p94
        %p320 = pneg %p118
        %p321 = pneg %p115
        %p322 = pneg %p144
        %p323 = pneg %p141
        %s324 = smul.u32 16, %s19
        %p325 = scmp.lt.s32.totalorder %s324, 47
        %s326 = scalar_select %p325, %s324, 47
        %s327 = smul.addr %s326, 4
        %s328 = scalar_lea.vmem %s4, %s327
        %s329 = smul.u32 16, %s19
        %s330 = smul.u32 16, %s20
        %p331 = scmp.lt.s32.totalorder %s330, 47
        %s332 = scalar_select %p331, %s330, 47
        %s333 = smul.addr %s332, 4
        %s334 = scalar_lea.vmem %s1, %s333
        %s335 = smul.u32 16, %s20
        %s336 = smul.u32 16, %s19
        %p337 = scmp.lt.s32.totalorder %s336, 47
        %s338 = scalar_select %p337, %s336, 47
        %s339 = smul.addr %s338, 4
        %s340 = scalar_lea.vmem %s4, %s339
        %s341 = smul.u32 16, %s19
        %p342 = scmp.eq.s32.totalorder %s20, 0
        // Predicated region
        $region78: #{gnn_forward.5} parent=72 // pred_check
          %p343 = pneg %p342
        $region79: #{gnn_forward.5} parent=72 // pred_check_branch
          %345 = sbr.rel (%p343) target = $region81
        $region80: #{gnn_forward.5} parent=72 // pred_region
          %346 = vst [vmem:[#allocation2] sm:$0xff] 0.0
          %347 = vst [vmem:[#allocation2 + $0x8] sm:$0xff] 0.0
          %348 = vst [vmem:[#allocation2 + $0x10] sm:$0xff] 0.0
          %349 = vst [vmem:[#allocation2 + $0x18] sm:$0xff] 0.0
          %350 = vst [vmem:[#allocation2 + $0x20] sm:$0xff] 0.0
          %351 = vst [vmem:[#allocation2 + $0x28] sm:$0xff] 0.0
          %352 = vst [vmem:[#allocation2 + $0x30] sm:$0xff] 0.0
          %353 = vst [vmem:[#allocation2 + $0x38] sm:$0xff] 0.0
          %354 = vst [vmem:[#allocation2 + $0x40] sm:$0xff] 0.0
          %355 = vst [vmem:[#allocation2 + $0x48] sm:$0xff] 0.0
          %356 = vst [vmem:[#allocation2 + $0x50] sm:$0xff] 0.0
          %357 = vst [vmem:[#allocation2 + $0x58] sm:$0xff] 0.0
          %358 = vst [vmem:[#allocation2 + $0x60] sm:$0xff] 0.0
          %359 = vst [vmem:[#allocation2 + $0x68] sm:$0xff] 0.0
          %360 = vst [vmem:[#allocation2 + $0x70] sm:$0xff] 0.0
          %361 = vst [vmem:[#allocation2 + $0x78] sm:$0xff] 0.0
        $region81: #{gnn_forward.5} parent=72 // pred_fallthru
          _
        %v362 = vld [vmem:[#allocation2] sm:$0xff]
        %v363 = vld [vmem:[#allocation2 + $0x8] sm:$0xff]
        %v364 = vld [vmem:[#allocation2 + $0x10] sm:$0xff]
        %v365 = vld [vmem:[#allocation2 + $0x18] sm:$0xff]
        %v366 = vld [vmem:[#allocation2 + $0x20] sm:$0xff]
        %v367 = vld [vmem:[#allocation2 + $0x28] sm:$0xff]
        %v368 = vld [vmem:[#allocation2 + $0x30] sm:$0xff]
        %v369 = vld [vmem:[#allocation2 + $0x38] sm:$0xff]
        %v370 = vld [vmem:[#allocation2 + $0x40] sm:$0xff]
        %v371 = vld [vmem:[#allocation2 + $0x48] sm:$0xff]
        %v372 = vld [vmem:[#allocation2 + $0x50] sm:$0xff]
        %v373 = vld [vmem:[#allocation2 + $0x58] sm:$0xff]
        %v374 = vld [vmem:[#allocation2 + $0x60] sm:$0xff]
        %v375 = vld [vmem:[#allocation2 + $0x68] sm:$0xff]
        %v376 = vld [vmem:[#allocation2 + $0x70] sm:$0xff]
        %v377 = vld [vmem:[#allocation2 + $0x78] sm:$0xff]
        %v378 = vld [vmem:[%s301] sm:$0xf]
        %v379 = vld [vmem:[%s301 + $0x4] sm:$0xf]
        %v380 = vld [vmem:[%s301 + $0x8] sm:$0xf]
        %v381 = vld [vmem:[%s301 + $0xc] sm:$0xf]
        %v382 = vld [vmem:[%s301 + $0x10] sm:$0xf]
        %v383 = vld [vmem:[%s301 + $0x14] sm:$0xf]
        %v384 = vld [vmem:[%s301 + $0x18] sm:$0xf]
        %v385 = vld [vmem:[%s301 + $0x1c] sm:$0xf]
        %v386 = vld [vmem:[%s301 + $0x20] sm:$0xf]
        %v387 = vld [vmem:[%s301 + $0x24] sm:$0xf]
        %v388 = vld [vmem:[%s301 + $0x28] sm:$0xf]
        %v389 = vld [vmem:[%s301 + $0x2c] sm:$0xf]
        %v390 = vld [vmem:[%s301 + $0x30] sm:$0xf]
        %v391 = vld [vmem:[%s301 + $0x34] sm:$0xf]
        %v392 = vld [vmem:[%s301 + $0x38] sm:$0xf]
        %v393 = vld [vmem:[%s301 + $0x3c] sm:$0xf]
        %v394 = vld [vmem:[%s334] sm:$0xf]
        %v395 = vld [vmem:[%s334 + $0x4] sm:$0xf]
        %v396 = vld [vmem:[%s334 + $0x8] sm:$0xf]
        %v397 = vld [vmem:[%s334 + $0xc] sm:$0xf]
        %v398 = vld [vmem:[%s334 + $0x10] sm:$0xf]
        %v399 = vld [vmem:[%s334 + $0x14] sm:$0xf]
        %v400 = vld [vmem:[%s334 + $0x18] sm:$0xf]
        %v401 = vld [vmem:[%s334 + $0x1c] sm:$0xf]
        %v402 = vld [vmem:[%s334 + $0x20] sm:$0xf]
        %v403 = vld [vmem:[%s334 + $0x24] sm:$0xf]
        %v404 = vld [vmem:[%s334 + $0x28] sm:$0xf]
        %v405 = vld [vmem:[%s334 + $0x2c] sm:$0xf]
        %v406 = vld [vmem:[%s334 + $0x30] sm:$0xf]
        %v407 = vld [vmem:[%s334 + $0x34] sm:$0xf]
        %v408 = vld [vmem:[%s334 + $0x38] sm:$0xf]
        %v409 = vld [vmem:[%s334 + $0x3c] sm:$0xf]
        %v426 = vunpack.c.l.b16 %v378
        %v427 = vunpack.c.l.b16 %v379
        %v428 = vunpack.c.l.b16 %v380
        %v429 = vunpack.c.l.b16 %v381
        %v430 = vunpack.c.l.b16 %v382
        %v431 = vunpack.c.l.b16 %v383
        %v432 = vunpack.c.l.b16 %v384
        %v433 = vunpack.c.l.b16 %v385
        %v434 = vunpack.c.l.b16 %v386
        %v435 = vunpack.c.l.b16 %v387
        %v436 = vunpack.c.l.b16 %v388
        %v437 = vunpack.c.l.b16 %v389
        %v438 = vunpack.c.l.b16 %v390
        %v439 = vunpack.c.l.b16 %v391
        %v440 = vunpack.c.l.b16 %v392
        %v441 = vunpack.c.l.b16 %v393
        %v442 = vpack.c.b16 %v427, %v426
        %v443 = vpack.c.b16 %v429, %v428
        %v444 = vpack.c.b16 %v431, %v430
        %v445 = vpack.c.b16 %v433, %v432
        %v446 = vpack.c.b16 %v435, %v434
        %v447 = vpack.c.b16 %v437, %v436
        %v448 = vpack.c.b16 %v439, %v438
        %v449 = vpack.c.b16 %v441, %v440
        %v474 = vunpack.c.l.b16 %v394
        %v475 = vunpack.c.l.b16 %v395
        %v476 = vunpack.c.l.b16 %v396
        %v477 = vunpack.c.l.b16 %v397
        %v478 = vunpack.c.l.b16 %v398
        %v479 = vunpack.c.l.b16 %v399
        %v480 = vunpack.c.l.b16 %v400
        %v481 = vunpack.c.l.b16 %v401
        %v482 = vunpack.c.l.b16 %v402
        %v483 = vunpack.c.l.b16 %v403
        %v484 = vunpack.c.l.b16 %v404
        %v485 = vunpack.c.l.b16 %v405
        %v486 = vunpack.c.l.b16 %v406
        %v487 = vunpack.c.l.b16 %v407
        %v488 = vunpack.c.l.b16 %v408
        %v489 = vunpack.c.l.b16 %v409
        %v490 = vpack.c.b16 %v475, %v474
        %v491 = vpack.c.b16 %v477, %v476
        %v492 = vpack.c.b16 %v479, %v478
        %v493 = vpack.c.b16 %v481, %v480
        %v494 = vpack.c.b16 %v483, %v482
        %v495 = vpack.c.b16 %v485, %v484
        %v496 = vpack.c.b16 %v487, %v486
        %v497 = vpack.c.b16 %v489, %v488
        %506 = vmatpush.bf16.msra.mxu0 %v497
        %507 = vmatpush.bf16.msra.mxu0 %v496
        %508 = vmatpush.bf16.msra.mxu0 %v495
        %509 = vmatpush.bf16.msra.mxu0 %v494
        %510 = vmatpush.bf16.msra.mxu0 %v493
        %511 = vmatpush.bf16.msra.mxu0 %v492
        %512 = vmatpush.bf16.msra.mxu0 %v491
        %513 = vmatpush.bf16.msra.mxu0 %v490
        %514 = vmatmul.bf16.gmra.mxu0 %v442
        %v515 = vpop.f32.mrf.mxu0
        %v516 = vadd.f32 0.0, %v515
        %v517 = vpop.f32.mrf.mxu0
        %v518 = vadd.f32 0.0, %v517
        %519 = vmatmul.bf16.gmra.mxu0 %v443
        %v520 = vpop.f32.mrf.mxu0
        %v521 = vadd.f32 0.0, %v520
        %v522 = vpop.f32.mrf.mxu0
        %v523 = vadd.f32 0.0, %v522
        %524 = vmatmul.bf16.gmra.mxu0 %v444
        %v525 = vpop.f32.mrf.mxu0
        %v526 = vadd.f32 0.0, %v525
        %v527 = vpop.f32.mrf.mxu0
        %v528 = vadd.f32 0.0, %v527
        %529 = vmatmul.bf16.gmra.mxu0 %v445
        %v530 = vpop.f32.mrf.mxu0
        %v531 = vadd.f32 0.0, %v530
        %v532 = vpop.f32.mrf.mxu0
        %v533 = vadd.f32 0.0, %v532
        %534 = vmatmul.bf16.gmra.mxu0 %v446
        %v535 = vpop.f32.mrf.mxu0
        %v536 = vadd.f32 0.0, %v535
        %v537 = vpop.f32.mrf.mxu0
        %v538 = vadd.f32 0.0, %v537
        %539 = vmatmul.bf16.gmra.mxu0 %v447
        %v540 = vpop.f32.mrf.mxu0
        %v541 = vadd.f32 0.0, %v540
        %v542 = vpop.f32.mrf.mxu0
        %v543 = vadd.f32 0.0, %v542
        %544 = vmatmul.bf16.gmra.mxu0 %v448
        %v545 = vpop.f32.mrf.mxu0
        %v546 = vadd.f32 0.0, %v545
        %v547 = vpop.f32.mrf.mxu0
        %v548 = vadd.f32 0.0, %v547
        %549 = vmatmul.bf16.gmra.mxu0 %v449
        %v550 = vpop.f32.mrf.mxu0
        %v551 = vadd.f32 0.0, %v550
        %v552 = vpop.f32.mrf.mxu0
        %v553 = vadd.f32 0.0, %v552
        %554 = vdwg.mxu0
        %v555 = vadd.f32 %v362, %v516
        %v556 = vadd.f32 %v363, %v518
        %v557 = vadd.f32 %v364, %v521
        %v558 = vadd.f32 %v365, %v523
        %v559 = vadd.f32 %v366, %v526
        %v560 = vadd.f32 %v367, %v528
        %v561 = vadd.f32 %v368, %v531
        %v562 = vadd.f32 %v369, %v533
        %v563 = vadd.f32 %v370, %v536
        %v564 = vadd.f32 %v371, %v538
        %v565 = vadd.f32 %v372, %v541
        %v566 = vadd.f32 %v373, %v543
        %v567 = vadd.f32 %v374, %v546
        %v568 = vadd.f32 %v375, %v548
        %v569 = vadd.f32 %v376, %v551
        %v570 = vadd.f32 %v377, %v553
        %571 = vst [vmem:[#allocation2] sm:$0xff] %v555
        %572 = vst [vmem:[#allocation2 + $0x8] sm:$0xff] %v556
        %573 = vst [vmem:[#allocation2 + $0x10] sm:$0xff] %v557
        %574 = vst [vmem:[#allocation2 + $0x18] sm:$0xff] %v558
        %575 = vst [vmem:[#allocation2 + $0x20] sm:$0xff] %v559
        %576 = vst [vmem:[#allocation2 + $0x28] sm:$0xff] %v560
        %577 = vst [vmem:[#allocation2 + $0x30] sm:$0xff] %v561
        %578 = vst [vmem:[#allocation2 + $0x38] sm:$0xff] %v562
        %579 = vst [vmem:[#allocation2 + $0x40] sm:$0xff] %v563
        %580 = vst [vmem:[#allocation2 + $0x48] sm:$0xff] %v564
        %581 = vst [vmem:[#allocation2 + $0x50] sm:$0xff] %v565
        %582 = vst [vmem:[#allocation2 + $0x58] sm:$0xff] %v566
        %583 = vst [vmem:[#allocation2 + $0x60] sm:$0xff] %v567
        %584 = vst [vmem:[#allocation2 + $0x68] sm:$0xff] %v568
        %585 = vst [vmem:[#allocation2 + $0x70] sm:$0xff] %v569
        %586 = vst [vmem:[#allocation2 + $0x78] sm:$0xff] %v570
        %p587 = scmp.eq.s32.totalorder %s20, 2
        // Predicated region
        $region82: #{gnn_forward.5} parent=72 // pred_check
          %p588 = pneg %p587
        $region83: #{gnn_forward.5} parent=72 // pred_check_branch
          %590 = sbr.rel (%p588) target = $region85
        $region84: #{gnn_forward.5} parent=72 // pred_region
          %v591 = vld [vmem:[#allocation2] sm:$0xff]
          %v592 = vld [vmem:[#allocation2 + $0x8] sm:$0xff]
          %v593 = vld [vmem:[#allocation2 + $0x10] sm:$0xff]
          %v594 = vld [vmem:[#allocation2 + $0x18] sm:$0xff]
          %v595 = vld [vmem:[#allocation2 + $0x20] sm:$0xff]
          %v596 = vld [vmem:[#allocation2 + $0x28] sm:$0xff]
          %v597 = vld [vmem:[#allocation2 + $0x30] sm:$0xff]
          %v598 = vld [vmem:[#allocation2 + $0x38] sm:$0xff]
          %v599 = vld [vmem:[#allocation2 + $0x40] sm:$0xff]
          %v600 = vld [vmem:[#allocation2 + $0x48] sm:$0xff]
          %v601 = vld [vmem:[#allocation2 + $0x50] sm:$0xff]
          %v602 = vld [vmem:[#allocation2 + $0x58] sm:$0xff]
          %v603 = vld [vmem:[#allocation2 + $0x60] sm:$0xff]
          %v604 = vld [vmem:[#allocation2 + $0x68] sm:$0xff]
          %v605 = vld [vmem:[#allocation2 + $0x70] sm:$0xff]
          %v606 = vld [vmem:[#allocation2 + $0x78] sm:$0xff]
          %v607 = vld [vmem:[%s2] sm:$0x1]
          %v609 = vperm.slane %v607, 0
          %v611 = vadd.f32 %v591, %v609
          %v612 = vadd.f32 %v592, %v609
          %v613 = vadd.f32 %v593, %v609
          %v614 = vadd.f32 %v594, %v609
          %v615 = vadd.f32 %v595, %v609
          %v616 = vadd.f32 %v596, %v609
          %v617 = vadd.f32 %v597, %v609
          %v618 = vadd.f32 %v598, %v609
          %v619 = vadd.f32 %v599, %v609
          %v620 = vadd.f32 %v600, %v609
          %v621 = vadd.f32 %v601, %v609
          %v622 = vadd.f32 %v602, %v609
          %v623 = vadd.f32 %v603, %v609
          %v624 = vadd.f32 %v604, %v609
          %v625 = vadd.f32 %v605, %v609
          %v626 = vadd.f32 %v606, %v609
          %v627 = vmax.f32 %v611, 0.0
          %v628 = vmax.f32 %v612, 0.0
          %v629 = vmax.f32 %v613, 0.0
          %v630 = vmax.f32 %v614, 0.0
          %v631 = vmax.f32 %v615, 0.0
          %v632 = vmax.f32 %v616, 0.0
          %v633 = vmax.f32 %v617, 0.0
          %v634 = vmax.f32 %v618, 0.0
          %v635 = vmax.f32 %v619, 0.0
          %v636 = vmax.f32 %v620, 0.0
          %v637 = vmax.f32 %v621, 0.0
          %v638 = vmax.f32 %v622, 0.0
          %v639 = vmax.f32 %v623, 0.0
          %v640 = vmax.f32 %v624, 0.0
          %v641 = vmax.f32 %v625, 0.0
          %v642 = vmax.f32 %v626, 0.0
          %v643 = vpack.c.bf16 %v628, %v627
          %v644 = vpack.c.bf16 %v630, %v629
          %v645 = vpack.c.bf16 %v632, %v631
          %v646 = vpack.c.bf16 %v634, %v633
          %v647 = vpack.c.bf16 %v636, %v635
          %v648 = vpack.c.bf16 %v638, %v637
          %v649 = vpack.c.bf16 %v640, %v639
          %v650 = vpack.c.bf16 %v642, %v641
          %v651 = vld [vmem:[%s3] sm:$0xf]
          %v652 = vld [vmem:[%s3 + $0x4] sm:$0xf]
          %v653 = vld [vmem:[%s3 + $0x8] sm:$0xf]
          %v654 = vld [vmem:[%s3 + $0xc] sm:$0xf]
          %v655 = vld [vmem:[%s3 + $0x10] sm:$0xf]
          %v656 = vld [vmem:[%s3 + $0x14] sm:$0xf]
          %v657 = vld [vmem:[%s3 + $0x18] sm:$0xf]
          %v658 = vld [vmem:[%s3 + $0x1c] sm:$0xf]
          %v659 = vld [vmem:[%s3 + $0x20] sm:$0xf]
          %v660 = vld [vmem:[%s3 + $0x24] sm:$0xf]
          %v661 = vld [vmem:[%s3 + $0x28] sm:$0xf]
          %v662 = vld [vmem:[%s3 + $0x2c] sm:$0xf]
          %v663 = vld [vmem:[%s3 + $0x30] sm:$0xf]
          %v664 = vld [vmem:[%s3 + $0x34] sm:$0xf]
          %v665 = vld [vmem:[%s3 + $0x38] sm:$0xf]
          %v666 = vld [vmem:[%s3 + $0x3c] sm:$0xf]
          %v683 = vunpack.c.l.b16 %v651
          %v684 = vunpack.c.l.b16 %v652
          %v685 = vunpack.c.l.b16 %v653
          %v686 = vunpack.c.l.b16 %v654
          %v687 = vunpack.c.l.b16 %v655
          %v688 = vunpack.c.l.b16 %v656
          %v689 = vunpack.c.l.b16 %v657
          %v690 = vunpack.c.l.b16 %v658
          %v691 = vunpack.c.l.b16 %v659
          %v692 = vunpack.c.l.b16 %v660
          %v693 = vunpack.c.l.b16 %v661
          %v694 = vunpack.c.l.b16 %v662
          %v695 = vunpack.c.l.b16 %v663
          %v696 = vunpack.c.l.b16 %v664
          %v697 = vunpack.c.l.b16 %v665
          %v698 = vunpack.c.l.b16 %v666
          %v699 = vpack.c.b16 %v684, %v683
          %v700 = vpack.c.b16 %v686, %v685
          %v701 = vpack.c.b16 %v688, %v687
          %v702 = vpack.c.b16 %v690, %v689
          %v703 = vpack.c.b16 %v692, %v691
          %v704 = vpack.c.b16 %v694, %v693
          %v705 = vpack.c.b16 %v696, %v695
          %v706 = vpack.c.b16 %v698, %v697
          %715 = vmatpush.bf16.msra.mxu0 %v706
          %716 = vmatpush.bf16.msra.mxu0 %v705
          %717 = vmatpush.bf16.msra.mxu0 %v704
          %718 = vmatpush.bf16.msra.mxu0 %v703
          %719 = vmatpush.bf16.msra.mxu0 %v702
          %720 = vmatpush.bf16.msra.mxu0 %v701
          %721 = vmatpush.bf16.msra.mxu0 %v700
          %722 = vmatpush.bf16.msra.mxu0 %v699
          %723 = vmatmul.bf16.gmra.mxu0 %v643
          %v724 = vpop.f32.mrf.mxu0
          %v725 = vadd.f32 0.0, %v724
          %v726 = vpop.f32.mrf.mxu0
          %v727 = vadd.f32 0.0, %v726
          %728 = vmatmul.bf16.gmra.mxu0 %v644
          %v729 = vpop.f32.mrf.mxu0
          %v730 = vadd.f32 0.0, %v729
          %v731 = vpop.f32.mrf.mxu0
          %v732 = vadd.f32 0.0, %v731
          %733 = vmatmul.bf16.gmra.mxu0 %v645
          %v734 = vpop.f32.mrf.mxu0
          %v735 = vadd.f32 0.0, %v734
          %v736 = vpop.f32.mrf.mxu0
          %v737 = vadd.f32 0.0, %v736
          %738 = vmatmul.bf16.gmra.mxu0 %v646
          %v739 = vpop.f32.mrf.mxu0
          %v740 = vadd.f32 0.0, %v739
          %v741 = vpop.f32.mrf.mxu0
          %v742 = vadd.f32 0.0, %v741
          %743 = vmatmul.bf16.gmra.mxu0 %v647
          %v744 = vpop.f32.mrf.mxu0
          %v745 = vadd.f32 0.0, %v744
          %v746 = vpop.f32.mrf.mxu0
          %v747 = vadd.f32 0.0, %v746
          %748 = vmatmul.bf16.gmra.mxu0 %v648
          %v749 = vpop.f32.mrf.mxu0
          %v750 = vadd.f32 0.0, %v749
          %v751 = vpop.f32.mrf.mxu0
          %v752 = vadd.f32 0.0, %v751
          %753 = vmatmul.bf16.gmra.mxu0 %v649
          %v754 = vpop.f32.mrf.mxu0
          %v755 = vadd.f32 0.0, %v754
          %v756 = vpop.f32.mrf.mxu0
          %v757 = vadd.f32 0.0, %v756
          %758 = vmatmul.bf16.gmra.mxu0 %v650
          %v759 = vpop.f32.mrf.mxu0
          %v760 = vadd.f32 0.0, %v759
          %v761 = vpop.f32.mrf.mxu0
          %v762 = vadd.f32 0.0, %v761
          %763 = vdwg.mxu0
          %v764 = vpack.c.bf16 %v725, %v725
          %v765 = vpack.c.bf16 %v727, %v727
          %v766 = vpack.c.bf16 %v730, %v730
          %v767 = vpack.c.bf16 %v732, %v732
          %v768 = vpack.c.bf16 %v735, %v735
          %v769 = vpack.c.bf16 %v737, %v737
          %v770 = vpack.c.bf16 %v740, %v740
          %v771 = vpack.c.bf16 %v742, %v742
          %v772 = vpack.c.bf16 %v745, %v745
          %v773 = vpack.c.bf16 %v747, %v747
          %v774 = vpack.c.bf16 %v750, %v750
          %v775 = vpack.c.bf16 %v752, %v752
          %v776 = vpack.c.bf16 %v755, %v755
          %v777 = vpack.c.bf16 %v757, %v757
          %v778 = vpack.c.bf16 %v760, %v760
          %v779 = vpack.c.bf16 %v762, %v762
          %780 = vst [vmem:[%s340] sm:$0xf] %v764
          %781 = vst [vmem:[%s340 + $0x4] sm:$0xf] %v765
          %782 = vst [vmem:[%s340 + $0x8] sm:$0xf] %v766
          %783 = vst [vmem:[%s340 + $0xc] sm:$0xf] %v767
          %784 = vst [vmem:[%s340 + $0x10] sm:$0xf] %v768
          %785 = vst [vmem:[%s340 + $0x14] sm:$0xf] %v769
          %786 = vst [vmem:[%s340 + $0x18] sm:$0xf] %v770
          %787 = vst [vmem:[%s340 + $0x1c] sm:$0xf] %v771
          %788 = vst [vmem:[%s340 + $0x20] sm:$0xf] %v772
          %789 = vst [vmem:[%s340 + $0x24] sm:$0xf] %v773
          %790 = vst [vmem:[%s340 + $0x28] sm:$0xf] %v774
          %791 = vst [vmem:[%s340 + $0x2c] sm:$0xf] %v775
          %792 = vst [vmem:[%s340 + $0x30] sm:$0xf] %v776
          %793 = vst [vmem:[%s340 + $0x34] sm:$0xf] %v777
          %794 = vst [vmem:[%s340 + $0x38] sm:$0xf] %v778
          %795 = vst [vmem:[%s340 + $0x3c] sm:$0xf] %v779
        $region85: #{gnn_forward.5} parent=72 // pred_fallthru
          _
        %s796 = smul.u32 16, %s19
        %p797 = scmp.lt.s32.totalorder %s796, 47
        %s798 = scalar_select %p797, %s796, 47
        %s799 = smul.addr %s798, 4
        %s800 = scalar_lea.vmem %s4, %s799
        // Predicated region
        $region86: #{gnn_forward.5} parent=72 // pred_check
          %p801 = pneg %p141
        $region87: #{gnn_forward.5} parent=72 // pred_check_branch
          %803 = sbr.rel (%p801) target = $region89
        $region88: #{gnn_forward.5} parent=72 // pred_region
          %s804 = smul.u32 16, %s19
        $region89: #{gnn_forward.5} parent=72 // pred_fallthru
          _
      $region73: #{gnn_forward.5} parent=5 // pred_fallthru
        _
      %p805 = scmp.le.s32.totalorder 2, %s10
      // Predicated region
      $region90: #{gnn_forward.5} parent=5 // pred_check
        %p806 = pneg %p805
      $region91: #{gnn_forward.5} parent=5 // pred_check_branch
        %808 = sbr.rel (%p806) target = $region93
      $region92: #{gnn_forward.5} parent=5 // pred_region
        %s809 = ssub.s32 %s10, 2
        // Predicated region
        $region94: #{gnn_forward.5} parent=92 // pred_check
          %p810 = pneg %p147
        $region95: #{gnn_forward.5} parent=92 // pred_check_branch
          %812 = sbr.rel (%p810) target = $region97
        $region96: #{gnn_forward.5} parent=92 // pred_region
          %s813 = smul.u32 16, %s21
          %p814 = scmp.lt.s32.totalorder %s813, 47
          %s815 = scalar_select %p814, %s813, 47
          %s816 = smul.addr %s815, 4
          %s817 = scalar_lea.vmem %s4, %s816
        $region97: #{gnn_forward.5} parent=92 // pred_fallthru
          _
      $region93: #{gnn_forward.5} parent=5 // pred_fallthru
        _
    $region6: #{gnn_forward.5} parent=1 // loop_footer
      %s14 = sadd.s32 1, %s10
    $region7: #{gnn_forward.5} parent=1 // loop_footer_branch
      %9 = sbr.rel target = $region3
    $region8: #{gnn_forward.5} parent=1 // loop_exit
      _

</llo_original>
